<compile_context>
chip_gen: v6e
topology: v6e:2x2x1
jax: 0.10.0
libtpu: 0.0.40
codegen_flags: <defaults>
</compile_context>

<pallas_src>
import functools

import jax
import jax.numpy as jnp
from jax.experimental import pallas as pl
from jax.experimental.pallas import tpu as pltpu

LANE = 128


def unfis_kernel(mu_ref, nis_ref, theta_ref, ws_ref, b_ref, x_ref, out_ref):
    """One batch tile.

    x_ref:  (n, TB, 128) f32 VMEM -- batch on (sublane, lane), fully dense.
    mu/nis(-1/sigma^2)/theta/ws(W*s): (n, r) f32 SMEM scalar tables.
    b_ref:  (1, r) f32 SMEM.
    out_ref: (TB, 128) f32 VMEM -- lane-dense per-batch-element output.
    """
    n = x_ref.shape[0]
    r = mu_ref.shape[1]
    tb, bl = out_ref.shape
    eps = jnp.float32(1e-6)

    num = jnp.zeros((tb, bl), jnp.float32)   # sum_j rule_j * lin_j
    den = jnp.zeros((tb, bl), jnp.float32)   # sum_j |rule_j|  (L1 norm)

    # rules (r) and features (n) are tiny & static -> unrolled at trace time.
    for j in range(r):
        a_min = None                         # numerator of the running min sel
        b_min = None                         # denominator of the running min sel
        lin = jnp.zeros((tb, bl), jnp.float32)
        for i in range(n):
            xi = x_ref[i]                                   # (TB, 128) dense
            d = xi - mu_ref[i, j]
            memb = jnp.exp(d * d * nis_ref[i, j])           # exp(-(x-mu)^2/sig^2)
            th = theta_ref[i, j]                            # scalar (SMEM)
            a = memb + eps                                  # sel numerator  (>0)
            bb = (1.0 - th) * memb + (th + eps)             # sel denominator(>0)
            if a_min is None:
                a_min, b_min = a, bb
            else:
                # min of positive fractions via cross-multiplication:
                # a/bb < a_min/b_min  <=>  a*b_min < a_min*bb   (no divide, VPU only)
                take = a * b_min < a_min * bb
                a_min = jnp.where(take, a, a_min)
                b_min = jnp.where(take, bb, b_min)
            lin = lin + xi * ws_ref[i, j]                   # VPU "matmul" (K=n)
        lin = lin + b_ref[0, j]
        rule = a_min / b_min                                # single exact divide per rule
        num = num + rule * lin
        den = den + jnp.abs(rule)                           # sel > 0, abs kept for literalness

    # F.normalize(p=1, dim=1) folded into the final reduction over rules:
    # sum_j (rule_j / max(sum|rule|,1e-12)) * lin_j == num / max(den, 1e-12)
    # NOTE: exact divide kept (pl.reciprocal(approx=True) would drift ~1e-3).
    out_ref[...] = num / jnp.maximum(den, jnp.float32(1e-12))


@functools.partial(jax.jit, static_argnames=("block_rows",))
def unfis_forward(x, mu, sigma, s, w, b, *, block_rows=512):
    """Unfis forward. x: (B, n_input). Returns (B, 1) float32."""
    x = jnp.asarray(x, jnp.float32)
    B, n = x.shape
    r = mu.shape[1]

    # Tiny (n, r) derived parameter tables (20 floats -> negligible XLA work).
    mu_f = jnp.asarray(mu, jnp.float32)
    theta = jax.nn.sigmoid(jnp.asarray(s, jnp.float32))
    nis = -1.0 / jnp.square(jnp.asarray(sigma, jnp.float32))     # -1/sigma^2
    ws = jnp.asarray(w, jnp.float32) * jnp.asarray(s, jnp.float32)
    bb = jnp.asarray(b, jnp.float32).reshape(1, r)

    # Lane-dense batch layout: pad B and view the batch as (rows, 128).
    block_rows = max(8, (int(block_rows) // 8) * 8)
    rb = pl.cdiv(B, LANE)
    if rb <= block_rows:
        tb = rb                       # single block; block == full dim is legal
        rb_pad = rb
    else:
        tb = block_rows               # multiple of 8 -> satisfies (8,128) rule
        rb_pad = pl.cdiv(rb, tb) * tb
    b_pad = rb_pad * LANE

    x_p = jnp.pad(x, ((0, b_pad - B), (0, 0)))
    x3 = x_p.T.reshape(n, rb_pad, LANE)          # (n, rows, 128): batch on lanes

    grid = (rb_pad // tb,)
    smem_spec = pl.BlockSpec(memory_space=pltpu.MemorySpace.SMEM)

    out2d = pl.pallas_call(
        unfis_kernel,
        out_shape=jax.ShapeDtypeStruct((rb_pad, LANE), jnp.float32),
        grid=grid,
        in_specs=[
            smem_spec,                                        # mu
            smem_spec,                                        # -1/sigma^2
            smem_spec,                                        # theta
            smem_spec,                                        # W*s
            smem_spec,                                        # bias
            pl.BlockSpec((n, tb, LANE), lambda i: (0, i, 0)),  # x tile
        ],
        out_specs=pl.BlockSpec((tb, LANE), lambda i: (i, 0)),
        compiler_params=pltpu.CompilerParams(
            dimension_semantics=("parallel",)),
    )(mu_f, nis, theta, ws, bb, x3)

    return out2d.reshape(b_pad)[:B].reshape(B, 1)


if __name__ == "__main__":
    # Small shapes consistent with the module: batch=8, n_input=4, rules=5
    B, N_INPUT, RULES = 8, 4, 5

    key = jax.random.PRNGKey(0)
    k_x, k_mu, k_sig, k_w, k_b, k_x2 = jax.random.split(key, 6)

    x = jax.random.normal(k_x, (B, N_INPUT), dtype=jnp.float32)
    mu = jax.random.uniform(k_mu, (N_INPUT, RULES), minval=-1.0, maxval=1.0,
                            dtype=jnp.float32)
    sigma = jax.random.uniform(k_sig, (N_INPUT, RULES), minval=0.5, maxval=1.5,
                               dtype=jnp.float32)
    s = jnp.full((N_INPUT, RULES), 1.5, dtype=jnp.float32)      # _selectionLayer._s
    w = jax.random.uniform(k_w, (N_INPUT, RULES), dtype=jnp.float32) - 0.5
    b = jax.random.uniform(k_b, (1, RULES), dtype=jnp.float32) - 0.5

    def reference(xv):
        memb = jnp.exp(-jnp.square(xv[:, :, None] - mu[None]) / jnp.square(sigma)[None])
        theta = 1.0 / (1.0 + jnp.exp(-s))
        sel = (memb + 1e-6) / ((1.0 - theta)[None] * memb + theta[None] + 1e-6)
        rule = jnp.min(sel, axis=1)
        wnorm = rule / jnp.maximum(jnp.sum(jnp.abs(rule), axis=1, keepdims=True), 1e-12)
        return jnp.sum(wnorm * (xv @ (w * s) + b), axis=1, keepdims=True)

    out = unfis_forward(x, mu, sigma, s, w, b)
    jax.block_until_ready(out)
    assert out.shape == (B, 1)
    assert jnp.allclose(out, reference(x), atol=1e-4, rtol=1e-3)

    # Larger smoke test exercising batch padding + a multi-step "parallel" grid.
    B2 = 3000
    x2 = jax.random.normal(k_x2, (B2, N_INPUT), dtype=jnp.float32)
    out2 = unfis_forward(x2, mu, sigma, s, w, b, block_rows=8)
    jax.block_until_ready(out2)
    assert out2.shape == (B2, 1)
    assert jnp.allclose(out2, reference(x2), atol=1e-4, rtol=1e-3)

    print("KERNEL_OK")
</pallas_src>

<mosaic_0001>
module attributes {stable_mosaic.version = 11 : i64} {
  func.func @unfis_kernel(%arg0: i32, %arg1: memref<4x5xf32, #tpu.memory_space<smem>>, %arg2: memref<4x5xf32, #tpu.memory_space<smem>>, %arg3: memref<4x5xf32, #tpu.memory_space<smem>>, %arg4: memref<4x5xf32, #tpu.memory_space<smem>>, %arg5: memref<1x5xf32, #tpu.memory_space<smem>>, %arg6: memref<4x1x128xf32, #tpu.memory_space<vmem>>, %arg7: memref<1x128xf32, #tpu.memory_space<vmem>>) attributes {dimension_semantics = [#tpu.dimension_semantics<parallel>], iteration_bounds = array<i64: 1>, scalar_prefetch = 0 : i64, scratch_operands = 0 : i64, tpu.core_type = #tpu.core_type<tc>, window_params = [{transform_indices = @transform_0, window_bounds = array<i64: 4, 5>}, {transform_indices = @transform_1, window_bounds = array<i64: 4, 5>}, {transform_indices = @transform_2, window_bounds = array<i64: 4, 5>}, {transform_indices = @transform_3, window_bounds = array<i64: 4, 5>}, {transform_indices = @transform_4, window_bounds = array<i64: 1, 5>}, {transform_indices = @transform_5, window_bounds = array<i64: 4, 1, 128>}, {transform_indices = @transform_6, window_bounds = array<i64: 1, 128>}]} {
    %cst = arith.constant 0.000000e+00 : f32
    %0 = vector.broadcast %cst : f32 to vector<1x128xf32>
    %cst_0 = arith.constant 0.000000e+00 : f32
    %1 = vector.broadcast %cst_0 : f32 to vector<1x128xf32>
    %cst_1 = arith.constant 0.000000e+00 : f32
    %2 = vector.broadcast %cst_1 : f32 to vector<1x128xf32>
    %c0 = arith.constant 0 : index
    %c0_2 = arith.constant 0 : index
    %c0_3 = arith.constant 0 : index
    %3 = vector.load %arg6[%c0, %c0_2, %c0_3] : memref<4x1x128xf32, #tpu.memory_space<vmem>>, vector<1x1x128xf32>
    %4 = vector.shape_cast %3 : vector<1x1x128xf32> to vector<1x128xf32>
    %c0_4 = arith.constant 0 : index
    %c0_5 = arith.constant 0 : index
    %5 = memref.load %arg1[%c0_4, %c0_5] : memref<4x5xf32, #tpu.memory_space<smem>>
    %6 = vector.broadcast %5 : f32 to vector<1x128xf32>
    %7 = arith.subf %4, %6 : vector<1x128xf32>
    %8 = arith.mulf %7, %7 : vector<1x128xf32>
    %c0_6 = arith.constant 0 : index
    %c0_7 = arith.constant 0 : index
    %9 = memref.load %arg2[%c0_6, %c0_7] : memref<4x5xf32, #tpu.memory_space<smem>>
    %10 = vector.broadcast %9 : f32 to vector<1x128xf32>
    %11 = arith.mulf %8, %10 : vector<1x128xf32>
    %12 = math.exp %11 : vector<1x128xf32>
    %c0_8 = arith.constant 0 : index
    %c0_9 = arith.constant 0 : index
    %13 = memref.load %arg3[%c0_8, %c0_9] : memref<4x5xf32, #tpu.memory_space<smem>>
    %cst_10 = arith.constant 9.99999997E-7 : f32
    %14 = vector.broadcast %cst_10 : f32 to vector<1x128xf32>
    %15 = arith.addf %12, %14 : vector<1x128xf32>
    %cst_11 = arith.constant 1.000000e+00 : f32
    %16 = arith.subf %cst_11, %13 : f32
    %17 = vector.broadcast %16 : f32 to vector<1x128xf32>
    %18 = arith.mulf %17, %12 : vector<1x128xf32>
    %cst_12 = arith.constant 9.99999997E-7 : f32
    %19 = arith.addf %13, %cst_12 : f32
    %20 = vector.broadcast %19 : f32 to vector<1x128xf32>
    %21 = arith.addf %18, %20 : vector<1x128xf32>
    %c0_13 = arith.constant 0 : index
    %c0_14 = arith.constant 0 : index
    %22 = memref.load %arg4[%c0_13, %c0_14] : memref<4x5xf32, #tpu.memory_space<smem>>
    %23 = vector.broadcast %22 : f32 to vector<1x128xf32>
    %24 = arith.mulf %4, %23 : vector<1x128xf32>
    %25 = arith.addf %2, %24 : vector<1x128xf32>
    %c1 = arith.constant 1 : index
    %c0_15 = arith.constant 0 : index
    %c0_16 = arith.constant 0 : index
    %26 = vector.load %arg6[%c1, %c0_15, %c0_16] : memref<4x1x128xf32, #tpu.memory_space<vmem>>, vector<1x1x128xf32>
    %27 = vector.shape_cast %26 : vector<1x1x128xf32> to vector<1x128xf32>
    %c1_17 = arith.constant 1 : index
    %c0_18 = arith.constant 0 : index
    %28 = memref.load %arg1[%c1_17, %c0_18] : memref<4x5xf32, #tpu.memory_space<smem>>
    %29 = vector.broadcast %28 : f32 to vector<1x128xf32>
    %30 = arith.subf %27, %29 : vector<1x128xf32>
    %31 = arith.mulf %30, %30 : vector<1x128xf32>
    %c1_19 = arith.constant 1 : index
    %c0_20 = arith.constant 0 : index
    %32 = memref.load %arg2[%c1_19, %c0_20] : memref<4x5xf32, #tpu.memory_space<smem>>
    %33 = vector.broadcast %32 : f32 to vector<1x128xf32>
    %34 = arith.mulf %31, %33 : vector<1x128xf32>
    %35 = math.exp %34 : vector<1x128xf32>
    %c1_21 = arith.constant 1 : index
    %c0_22 = arith.constant 0 : index
    %36 = memref.load %arg3[%c1_21, %c0_22] : memref<4x5xf32, #tpu.memory_space<smem>>
    %cst_23 = arith.constant 9.99999997E-7 : f32
    %37 = vector.broadcast %cst_23 : f32 to vector<1x128xf32>
    %38 = arith.addf %35, %37 : vector<1x128xf32>
    %cst_24 = arith.constant 1.000000e+00 : f32
    %39 = arith.subf %cst_24, %36 : f32
    %40 = vector.broadcast %39 : f32 to vector<1x128xf32>
    %41 = arith.mulf %40, %35 : vector<1x128xf32>
    %cst_25 = arith.constant 9.99999997E-7 : f32
    %42 = arith.addf %36, %cst_25 : f32
    %43 = vector.broadcast %42 : f32 to vector<1x128xf32>
    %44 = arith.addf %41, %43 : vector<1x128xf32>
    %45 = arith.mulf %38, %21 : vector<1x128xf32>
    %46 = arith.mulf %15, %44 : vector<1x128xf32>
    %47 = arith.cmpf olt, %45, %46 : vector<1x128xf32>
    %48 = arith.select %47, %38, %15 : vector<1x128xi1>, vector<1x128xf32>
    %49 = arith.select %47, %44, %21 : vector<1x128xi1>, vector<1x128xf32>
    %c1_26 = arith.constant 1 : index
    %c0_27 = arith.constant 0 : index
    %50 = memref.load %arg4[%c1_26, %c0_27] : memref<4x5xf32, #tpu.memory_space<smem>>
    %51 = vector.broadcast %50 : f32 to vector<1x128xf32>
    %52 = arith.mulf %27, %51 : vector<1x128xf32>
    %53 = arith.addf %25, %52 : vector<1x128xf32>
    %c2 = arith.constant 2 : index
    %c0_28 = arith.constant 0 : index
    %c0_29 = arith.constant 0 : index
    %54 = vector.load %arg6[%c2, %c0_28, %c0_29] : memref<4x1x128xf32, #tpu.memory_space<vmem>>, vector<1x1x128xf32>
    %55 = vector.shape_cast %54 : vector<1x1x128xf32> to vector<1x128xf32>
    %c2_30 = arith.constant 2 : index
    %c0_31 = arith.constant 0 : index
    %56 = memref.load %arg1[%c2_30, %c0_31] : memref<4x5xf32, #tpu.memory_space<smem>>
    %57 = vector.broadcast %56 : f32 to vector<1x128xf32>
    %58 = arith.subf %55, %57 : vector<1x128xf32>
    %59 = arith.mulf %58, %58 : vector<1x128xf32>
    %c2_32 = arith.constant 2 : index
    %c0_33 = arith.constant 0 : index
    %60 = memref.load %arg2[%c2_32, %c0_33] : memref<4x5xf32, #tpu.memory_space<smem>>
    %61 = vector.broadcast %60 : f32 to vector<1x128xf32>
    %62 = arith.mulf %59, %61 : vector<1x128xf32>
    %63 = math.exp %62 : vector<1x128xf32>
    %c2_34 = arith.constant 2 : index
    %c0_35 = arith.constant 0 : index
    %64 = memref.load %arg3[%c2_34, %c0_35] : memref<4x5xf32, #tpu.memory_space<smem>>
    %cst_36 = arith.constant 9.99999997E-7 : f32
    %65 = vector.broadcast %cst_36 : f32 to vector<1x128xf32>
    %66 = arith.addf %63, %65 : vector<1x128xf32>
    %cst_37 = arith.constant 1.000000e+00 : f32
    %67 = arith.subf %cst_37, %64 : f32
    %68 = vector.broadcast %67 : f32 to vector<1x128xf32>
    %69 = arith.mulf %68, %63 : vector<1x128xf32>
    %cst_38 = arith.constant 9.99999997E-7 : f32
    %70 = arith.addf %64, %cst_38 : f32
    %71 = vector.broadcast %70 : f32 to vector<1x128xf32>
    %72 = arith.addf %69, %71 : vector<1x128xf32>
    %73 = arith.mulf %66, %49 : vector<1x128xf32>
    %74 = arith.mulf %48, %72 : vector<1x128xf32>
    %75 = arith.cmpf olt, %73, %74 : vector<1x128xf32>
    %76 = arith.select %75, %66, %48 : vector<1x128xi1>, vector<1x128xf32>
    %77 = arith.select %75, %72, %49 : vector<1x128xi1>, vector<1x128xf32>
    %c2_39 = arith.constant 2 : index
    %c0_40 = arith.constant 0 : index
    %78 = memref.load %arg4[%c2_39, %c0_40] : memref<4x5xf32, #tpu.memory_space<smem>>
    %79 = vector.broadcast %78 : f32 to vector<1x128xf32>
    %80 = arith.mulf %55, %79 : vector<1x128xf32>
    %81 = arith.addf %53, %80 : vector<1x128xf32>
    %c3 = arith.constant 3 : index
    %c0_41 = arith.constant 0 : index
    %c0_42 = arith.constant 0 : index
    %82 = vector.load %arg6[%c3, %c0_41, %c0_42] : memref<4x1x128xf32, #tpu.memory_space<vmem>>, vector<1x1x128xf32>
    %83 = vector.shape_cast %82 : vector<1x1x128xf32> to vector<1x128xf32>
    %c3_43 = arith.constant 3 : index
    %c0_44 = arith.constant 0 : index
    %84 = memref.load %arg1[%c3_43, %c0_44] : memref<4x5xf32, #tpu.memory_space<smem>>
    %85 = vector.broadcast %84 : f32 to vector<1x128xf32>
    %86 = arith.subf %83, %85 : vector<1x128xf32>
    %87 = arith.mulf %86, %86 : vector<1x128xf32>
    %c3_45 = arith.constant 3 : index
    %c0_46 = arith.constant 0 : index
    %88 = memref.load %arg2[%c3_45, %c0_46] : memref<4x5xf32, #tpu.memory_space<smem>>
    %89 = vector.broadcast %88 : f32 to vector<1x128xf32>
    %90 = arith.mulf %87, %89 : vector<1x128xf32>
    %91 = math.exp %90 : vector<1x128xf32>
    %c3_47 = arith.constant 3 : index
    %c0_48 = arith.constant 0 : index
    %92 = memref.load %arg3[%c3_47, %c0_48] : memref<4x5xf32, #tpu.memory_space<smem>>
    %cst_49 = arith.constant 9.99999997E-7 : f32
    %93 = vector.broadcast %cst_49 : f32 to vector<1x128xf32>
    %94 = arith.addf %91, %93 : vector<1x128xf32>
    %cst_50 = arith.constant 1.000000e+00 : f32
    %95 = arith.subf %cst_50, %92 : f32
    %96 = vector.broadcast %95 : f32 to vector<1x128xf32>
    %97 = arith.mulf %96, %91 : vector<1x128xf32>
    %cst_51 = arith.constant 9.99999997E-7 : f32
    %98 = arith.addf %92, %cst_51 : f32
    %99 = vector.broadcast %98 : f32 to vector<1x128xf32>
    %100 = arith.addf %97, %99 : vector<1x128xf32>
    %101 = arith.mulf %94, %77 : vector<1x128xf32>
    %102 = arith.mulf %76, %100 : vector<1x128xf32>
    %103 = arith.cmpf olt, %101, %102 : vector<1x128xf32>
    %104 = arith.select %103, %94, %76 : vector<1x128xi1>, vector<1x128xf32>
    %105 = arith.select %103, %100, %77 : vector<1x128xi1>, vector<1x128xf32>
    %c3_52 = arith.constant 3 : index
    %c0_53 = arith.constant 0 : index
    %106 = memref.load %arg4[%c3_52, %c0_53] : memref<4x5xf32, #tpu.memory_space<smem>>
    %107 = vector.broadcast %106 : f32 to vector<1x128xf32>
    %108 = arith.mulf %83, %107 : vector<1x128xf32>
    %109 = arith.addf %81, %108 : vector<1x128xf32>
    %c0_54 = arith.constant 0 : index
    %c0_55 = arith.constant 0 : index
    %110 = memref.load %arg5[%c0_54, %c0_55] : memref<1x5xf32, #tpu.memory_space<smem>>
    %111 = vector.broadcast %110 : f32 to vector<1x128xf32>
    %112 = arith.addf %109, %111 : vector<1x128xf32>
    %113 = arith.divf %104, %105 : vector<1x128xf32>
    %114 = arith.mulf %113, %112 : vector<1x128xf32>
    %115 = arith.addf %0, %114 : vector<1x128xf32>
    %116 = math.absf %113 : vector<1x128xf32>
    %117 = arith.addf %1, %116 : vector<1x128xf32>
    %cst_56 = arith.constant 0.000000e+00 : f32
    %118 = vector.broadcast %cst_56 : f32 to vector<1x128xf32>
    %c0_57 = arith.constant 0 : index
    %c0_58 = arith.constant 0 : index
    %c0_59 = arith.constant 0 : index
    %119 = vector.load %arg6[%c0_57, %c0_58, %c0_59] : memref<4x1x128xf32, #tpu.memory_space<vmem>>, vector<1x1x128xf32>
    %120 = vector.shape_cast %119 : vector<1x1x128xf32> to vector<1x128xf32>
    %c0_60 = arith.constant 0 : index
    %c1_61 = arith.constant 1 : index
    %121 = memref.load %arg1[%c0_60, %c1_61] : memref<4x5xf32, #tpu.memory_space<smem>>
    %122 = vector.broadcast %121 : f32 to vector<1x128xf32>
    %123 = arith.subf %120, %122 : vector<1x128xf32>
    %124 = arith.mulf %123, %123 : vector<1x128xf32>
    %c0_62 = arith.constant 0 : index
    %c1_63 = arith.constant 1 : index
    %125 = memref.load %arg2[%c0_62, %c1_63] : memref<4x5xf32, #tpu.memory_space<smem>>
    %126 = vector.broadcast %125 : f32 to vector<1x128xf32>
    %127 = arith.mulf %124, %126 : vector<1x128xf32>
    %128 = math.exp %127 : vector<1x128xf32>
    %c0_64 = arith.constant 0 : index
    %c1_65 = arith.constant 1 : index
    %129 = memref.load %arg3[%c0_64, %c1_65] : memref<4x5xf32, #tpu.memory_space<smem>>
    %cst_66 = arith.constant 9.99999997E-7 : f32
    %130 = vector.broadcast %cst_66 : f32 to vector<1x128xf32>
    %131 = arith.addf %128, %130 : vector<1x128xf32>
    %cst_67 = arith.constant 1.000000e+00 : f32
    %132 = arith.subf %cst_67, %129 : f32
    %133 = vector.broadcast %132 : f32 to vector<1x128xf32>
    %134 = arith.mulf %133, %128 : vector<1x128xf32>
    %cst_68 = arith.constant 9.99999997E-7 : f32
    %135 = arith.addf %129, %cst_68 : f32
    %136 = vector.broadcast %135 : f32 to vector<1x128xf32>
    %137 = arith.addf %134, %136 : vector<1x128xf32>
    %c0_69 = arith.constant 0 : index
    %c1_70 = arith.constant 1 : index
    %138 = memref.load %arg4[%c0_69, %c1_70] : memref<4x5xf32, #tpu.memory_space<smem>>
    %139 = vector.broadcast %138 : f32 to vector<1x128xf32>
    %140 = arith.mulf %120, %139 : vector<1x128xf32>
    %141 = arith.addf %118, %140 : vector<1x128xf32>
    %c1_71 = arith.constant 1 : index
    %c0_72 = arith.constant 0 : index
    %c0_73 = arith.constant 0 : index
    %142 = vector.load %arg6[%c1_71, %c0_72, %c0_73] : memref<4x1x128xf32, #tpu.memory_space<vmem>>, vector<1x1x128xf32>
    %143 = vector.shape_cast %142 : vector<1x1x128xf32> to vector<1x128xf32>
    %c1_74 = arith.constant 1 : index
    %c1_75 = arith.constant 1 : index
    %144 = memref.load %arg1[%c1_74, %c1_75] : memref<4x5xf32, #tpu.memory_space<smem>>
    %145 = vector.broadcast %144 : f32 to vector<1x128xf32>
    %146 = arith.subf %143, %145 : vector<1x128xf32>
    %147 = arith.mulf %146, %146 : vector<1x128xf32>
    %c1_76 = arith.constant 1 : index
    %c1_77 = arith.constant 1 : index
    %148 = memref.load %arg2[%c1_76, %c1_77] : memref<4x5xf32, #tpu.memory_space<smem>>
    %149 = vector.broadcast %148 : f32 to vector<1x128xf32>
    %150 = arith.mulf %147, %149 : vector<1x128xf32>
    %151 = math.exp %150 : vector<1x128xf32>
    %c1_78 = arith.constant 1 : index
    %c1_79 = arith.constant 1 : index
    %152 = memref.load %arg3[%c1_78, %c1_79] : memref<4x5xf32, #tpu.memory_space<smem>>
    %cst_80 = arith.constant 9.99999997E-7 : f32
    %153 = vector.broadcast %cst_80 : f32 to vector<1x128xf32>
    %154 = arith.addf %151, %153 : vector<1x128xf32>
    %cst_81 = arith.constant 1.000000e+00 : f32
    %155 = arith.subf %cst_81, %152 : f32
    %156 = vector.broadcast %155 : f32 to vector<1x128xf32>
    %157 = arith.mulf %156, %151 : vector<1x128xf32>
    %cst_82 = arith.constant 9.99999997E-7 : f32
    %158 = arith.addf %152, %cst_82 : f32
    %159 = vector.broadcast %158 : f32 to vector<1x128xf32>
    %160 = arith.addf %157, %159 : vector<1x128xf32>
    %161 = arith.mulf %154, %137 : vector<1x128xf32>
    %162 = arith.mulf %131, %160 : vector<1x128xf32>
    %163 = arith.cmpf olt, %161, %162 : vector<1x128xf32>
    %164 = arith.select %163, %154, %131 : vector<1x128xi1>, vector<1x128xf32>
    %165 = arith.select %163, %160, %137 : vector<1x128xi1>, vector<1x128xf32>
    %c1_83 = arith.constant 1 : index
    %c1_84 = arith.constant 1 : index
    %166 = memref.load %arg4[%c1_83, %c1_84] : memref<4x5xf32, #tpu.memory_space<smem>>
    %167 = vector.broadcast %166 : f32 to vector<1x128xf32>
    %168 = arith.mulf %143, %167 : vector<1x128xf32>
    %169 = arith.addf %141, %168 : vector<1x128xf32>
    %c2_85 = arith.constant 2 : index
    %c0_86 = arith.constant 0 : index
    %c0_87 = arith.constant 0 : index
    %170 = vector.load %arg6[%c2_85, %c0_86, %c0_87] : memref<4x1x128xf32, #tpu.memory_space<vmem>>, vector<1x1x128xf32>
    %171 = vector.shape_cast %170 : vector<1x1x128xf32> to vector<1x128xf32>
    %c2_88 = arith.constant 2 : index
    %c1_89 = arith.constant 1 : index
    %172 = memref.load %arg1[%c2_88, %c1_89] : memref<4x5xf32, #tpu.memory_space<smem>>
    %173 = vector.broadcast %172 : f32 to vector<1x128xf32>
    %174 = arith.subf %171, %173 : vector<1x128xf32>
    %175 = arith.mulf %174, %174 : vector<1x128xf32>
    %c2_90 = arith.constant 2 : index
    %c1_91 = arith.constant 1 : index
    %176 = memref.load %arg2[%c2_90, %c1_91] : memref<4x5xf32, #tpu.memory_space<smem>>
    %177 = vector.broadcast %176 : f32 to vector<1x128xf32>
    %178 = arith.mulf %175, %177 : vector<1x128xf32>
    %179 = math.exp %178 : vector<1x128xf32>
    %c2_92 = arith.constant 2 : index
    %c1_93 = arith.constant 1 : index
    %180 = memref.load %arg3[%c2_92, %c1_93] : memref<4x5xf32, #tpu.memory_space<smem>>
    %cst_94 = arith.constant 9.99999997E-7 : f32
    %181 = vector.broadcast %cst_94 : f32 to vector<1x128xf32>
    %182 = arith.addf %179, %181 : vector<1x128xf32>
    %cst_95 = arith.constant 1.000000e+00 : f32
    %183 = arith.subf %cst_95, %180 : f32
    %184 = vector.broadcast %183 : f32 to vector<1x128xf32>
    %185 = arith.mulf %184, %179 : vector<1x128xf32>
    %cst_96 = arith.constant 9.99999997E-7 : f32
    %186 = arith.addf %180, %cst_96 : f32
    %187 = vector.broadcast %186 : f32 to vector<1x128xf32>
    %188 = arith.addf %185, %187 : vector<1x128xf32>
    %189 = arith.mulf %182, %165 : vector<1x128xf32>
    %190 = arith.mulf %164, %188 : vector<1x128xf32>
    %191 = arith.cmpf olt, %189, %190 : vector<1x128xf32>
    %192 = arith.select %191, %182, %164 : vector<1x128xi1>, vector<1x128xf32>
    %193 = arith.select %191, %188, %165 : vector<1x128xi1>, vector<1x128xf32>
    %c2_97 = arith.constant 2 : index
    %c1_98 = arith.constant 1 : index
    %194 = memref.load %arg4[%c2_97, %c1_98] : memref<4x5xf32, #tpu.memory_space<smem>>
    %195 = vector.broadcast %194 : f32 to vector<1x128xf32>
    %196 = arith.mulf %171, %195 : vector<1x128xf32>
    %197 = arith.addf %169, %196 : vector<1x128xf32>
    %c3_99 = arith.constant 3 : index
    %c0_100 = arith.constant 0 : index
    %c0_101 = arith.constant 0 : index
    %198 = vector.load %arg6[%c3_99, %c0_100, %c0_101] : memref<4x1x128xf32, #tpu.memory_space<vmem>>, vector<1x1x128xf32>
    %199 = vector.shape_cast %198 : vector<1x1x128xf32> to vector<1x128xf32>
    %c3_102 = arith.constant 3 : index
    %c1_103 = arith.constant 1 : index
    %200 = memref.load %arg1[%c3_102, %c1_103] : memref<4x5xf32, #tpu.memory_space<smem>>
    %201 = vector.broadcast %200 : f32 to vector<1x128xf32>
    %202 = arith.subf %199, %201 : vector<1x128xf32>
    %203 = arith.mulf %202, %202 : vector<1x128xf32>
    %c3_104 = arith.constant 3 : index
    %c1_105 = arith.constant 1 : index
    %204 = memref.load %arg2[%c3_104, %c1_105] : memref<4x5xf32, #tpu.memory_space<smem>>
    %205 = vector.broadcast %204 : f32 to vector<1x128xf32>
    %206 = arith.mulf %203, %205 : vector<1x128xf32>
    %207 = math.exp %206 : vector<1x128xf32>
    %c3_106 = arith.constant 3 : index
    %c1_107 = arith.constant 1 : index
    %208 = memref.load %arg3[%c3_106, %c1_107] : memref<4x5xf32, #tpu.memory_space<smem>>
    %cst_108 = arith.constant 9.99999997E-7 : f32
    %209 = vector.broadcast %cst_108 : f32 to vector<1x128xf32>
    %210 = arith.addf %207, %209 : vector<1x128xf32>
    %cst_109 = arith.constant 1.000000e+00 : f32
    %211 = arith.subf %cst_109, %208 : f32
    %212 = vector.broadcast %211 : f32 to vector<1x128xf32>
    %213 = arith.mulf %212, %207 : vector<1x128xf32>
    %cst_110 = arith.constant 9.99999997E-7 : f32
    %214 = arith.addf %208, %cst_110 : f32
    %215 = vector.broadcast %214 : f32 to vector<1x128xf32>
    %216 = arith.addf %213, %215 : vector<1x128xf32>
    %217 = arith.mulf %210, %193 : vector<1x128xf32>
    %218 = arith.mulf %192, %216 : vector<1x128xf32>
    %219 = arith.cmpf olt, %217, %218 : vector<1x128xf32>
    %220 = arith.select %219, %210, %192 : vector<1x128xi1>, vector<1x128xf32>
    %221 = arith.select %219, %216, %193 : vector<1x128xi1>, vector<1x128xf32>
    %c3_111 = arith.constant 3 : index
    %c1_112 = arith.constant 1 : index
    %222 = memref.load %arg4[%c3_111, %c1_112] : memref<4x5xf32, #tpu.memory_space<smem>>
    %223 = vector.broadcast %222 : f32 to vector<1x128xf32>
    %224 = arith.mulf %199, %223 : vector<1x128xf32>
    %225 = arith.addf %197, %224 : vector<1x128xf32>
    %c0_113 = arith.constant 0 : index
    %c1_114 = arith.constant 1 : index
    %226 = memref.load %arg5[%c0_113, %c1_114] : memref<1x5xf32, #tpu.memory_space<smem>>
    %227 = vector.broadcast %226 : f32 to vector<1x128xf32>
    %228 = arith.addf %225, %227 : vector<1x128xf32>
    %229 = arith.divf %220, %221 : vector<1x128xf32>
    %230 = arith.mulf %229, %228 : vector<1x128xf32>
    %231 = arith.addf %115, %230 : vector<1x128xf32>
    %232 = math.absf %229 : vector<1x128xf32>
    %233 = arith.addf %117, %232 : vector<1x128xf32>
    %cst_115 = arith.constant 0.000000e+00 : f32
    %234 = vector.broadcast %cst_115 : f32 to vector<1x128xf32>
    %c0_116 = arith.constant 0 : index
    %c0_117 = arith.constant 0 : index
    %c0_118 = arith.constant 0 : index
    %235 = vector.load %arg6[%c0_116, %c0_117, %c0_118] : memref<4x1x128xf32, #tpu.memory_space<vmem>>, vector<1x1x128xf32>
    %236 = vector.shape_cast %235 : vector<1x1x128xf32> to vector<1x128xf32>
    %c0_119 = arith.constant 0 : index
    %c2_120 = arith.constant 2 : index
    %237 = memref.load %arg1[%c0_119, %c2_120] : memref<4x5xf32, #tpu.memory_space<smem>>
    %238 = vector.broadcast %237 : f32 to vector<1x128xf32>
    %239 = arith.subf %236, %238 : vector<1x128xf32>
    %240 = arith.mulf %239, %239 : vector<1x128xf32>
    %c0_121 = arith.constant 0 : index
    %c2_122 = arith.constant 2 : index
    %241 = memref.load %arg2[%c0_121, %c2_122] : memref<4x5xf32, #tpu.memory_space<smem>>
    %242 = vector.broadcast %241 : f32 to vector<1x128xf32>
    %243 = arith.mulf %240, %242 : vector<1x128xf32>
    %244 = math.exp %243 : vector<1x128xf32>
    %c0_123 = arith.constant 0 : index
    %c2_124 = arith.constant 2 : index
    %245 = memref.load %arg3[%c0_123, %c2_124] : memref<4x5xf32, #tpu.memory_space<smem>>
    %cst_125 = arith.constant 9.99999997E-7 : f32
    %246 = vector.broadcast %cst_125 : f32 to vector<1x128xf32>
    %247 = arith.addf %244, %246 : vector<1x128xf32>
    %cst_126 = arith.constant 1.000000e+00 : f32
    %248 = arith.subf %cst_126, %245 : f32
    %249 = vector.broadcast %248 : f32 to vector<1x128xf32>
    %250 = arith.mulf %249, %244 : vector<1x128xf32>
    %cst_127 = arith.constant 9.99999997E-7 : f32
    %251 = arith.addf %245, %cst_127 : f32
    %252 = vector.broadcast %251 : f32 to vector<1x128xf32>
    %253 = arith.addf %250, %252 : vector<1x128xf32>
    %c0_128 = arith.constant 0 : index
    %c2_129 = arith.constant 2 : index
    %254 = memref.load %arg4[%c0_128, %c2_129] : memref<4x5xf32, #tpu.memory_space<smem>>
    %255 = vector.broadcast %254 : f32 to vector<1x128xf32>
    %256 = arith.mulf %236, %255 : vector<1x128xf32>
    %257 = arith.addf %234, %256 : vector<1x128xf32>
    %c1_130 = arith.constant 1 : index
    %c0_131 = arith.constant 0 : index
    %c0_132 = arith.constant 0 : index
    %258 = vector.load %arg6[%c1_130, %c0_131, %c0_132] : memref<4x1x128xf32, #tpu.memory_space<vmem>>, vector<1x1x128xf32>
    %259 = vector.shape_cast %258 : vector<1x1x128xf32> to vector<1x128xf32>
    %c1_133 = arith.constant 1 : index
    %c2_134 = arith.constant 2 : index
    %260 = memref.load %arg1[%c1_133, %c2_134] : memref<4x5xf32, #tpu.memory_space<smem>>
    %261 = vector.broadcast %260 : f32 to vector<1x128xf32>
    %262 = arith.subf %259, %261 : vector<1x128xf32>
    %263 = arith.mulf %262, %262 : vector<1x128xf32>
    %c1_135 = arith.constant 1 : index
    %c2_136 = arith.constant 2 : index
    %264 = memref.load %arg2[%c1_135, %c2_136] : memref<4x5xf32, #tpu.memory_space<smem>>
    %265 = vector.broadcast %264 : f32 to vector<1x128xf32>
    %266 = arith.mulf %263, %265 : vector<1x128xf32>
    %267 = math.exp %266 : vector<1x128xf32>
    %c1_137 = arith.constant 1 : index
    %c2_138 = arith.constant 2 : index
    %268 = memref.load %arg3[%c1_137, %c2_138] : memref<4x5xf32, #tpu.memory_space<smem>>
    %cst_139 = arith.constant 9.99999997E-7 : f32
    %269 = vector.broadcast %cst_139 : f32 to vector<1x128xf32>
    %270 = arith.addf %267, %269 : vector<1x128xf32>
    %cst_140 = arith.constant 1.000000e+00 : f32
    %271 = arith.subf %cst_140, %268 : f32
    %272 = vector.broadcast %271 : f32 to vector<1x128xf32>
    %273 = arith.mulf %272, %267 : vector<1x128xf32>
    %cst_141 = arith.constant 9.99999997E-7 : f32
    %274 = arith.addf %268, %cst_141 : f32
    %275 = vector.broadcast %274 : f32 to vector<1x128xf32>
    %276 = arith.addf %273, %275 : vector<1x128xf32>
    %277 = arith.mulf %270, %253 : vector<1x128xf32>
    %278 = arith.mulf %247, %276 : vector<1x128xf32>
    %279 = arith.cmpf olt, %277, %278 : vector<1x128xf32>
    %280 = arith.select %279, %270, %247 : vector<1x128xi1>, vector<1x128xf32>
    %281 = arith.select %279, %276, %253 : vector<1x128xi1>, vector<1x128xf32>
    %c1_142 = arith.constant 1 : index
    %c2_143 = arith.constant 2 : index
    %282 = memref.load %arg4[%c1_142, %c2_143] : memref<4x5xf32, #tpu.memory_space<smem>>
    %283 = vector.broadcast %282 : f32 to vector<1x128xf32>
    %284 = arith.mulf %259, %283 : vector<1x128xf32>
    %285 = arith.addf %257, %284 : vector<1x128xf32>
    %c2_144 = arith.constant 2 : index
    %c0_145 = arith.constant 0 : index
    %c0_146 = arith.constant 0 : index
    %286 = vector.load %arg6[%c2_144, %c0_145, %c0_146] : memref<4x1x128xf32, #tpu.memory_space<vmem>>, vector<1x1x128xf32>
    %287 = vector.shape_cast %286 : vector<1x1x128xf32> to vector<1x128xf32>
    %c2_147 = arith.constant 2 : index
    %c2_148 = arith.constant 2 : index
    %288 = memref.load %arg1[%c2_147, %c2_148] : memref<4x5xf32, #tpu.memory_space<smem>>
    %289 = vector.broadcast %288 : f32 to vector<1x128xf32>
    %290 = arith.subf %287, %289 : vector<1x128xf32>
    %291 = arith.mulf %290, %290 : vector<1x128xf32>
    %c2_149 = arith.constant 2 : index
    %c2_150 = arith.constant 2 : index
    %292 = memref.load %arg2[%c2_149, %c2_150] : memref<4x5xf32, #tpu.memory_space<smem>>
    %293 = vector.broadcast %292 : f32 to vector<1x128xf32>
    %294 = arith.mulf %291, %293 : vector<1x128xf32>
    %295 = math.exp %294 : vector<1x128xf32>
    %c2_151 = arith.constant 2 : index
    %c2_152 = arith.constant 2 : index
    %296 = memref.load %arg3[%c2_151, %c2_152] : memref<4x5xf32, #tpu.memory_space<smem>>
    %cst_153 = arith.constant 9.99999997E-7 : f32
    %297 = vector.broadcast %cst_153 : f32 to vector<1x128xf32>
    %298 = arith.addf %295, %297 : vector<1x128xf32>
    %cst_154 = arith.constant 1.000000e+00 : f32
    %299 = arith.subf %cst_154, %296 : f32
    %300 = vector.broadcast %299 : f32 to vector<1x128xf32>
    %301 = arith.mulf %300, %295 : vector<1x128xf32>
    %cst_155 = arith.constant 9.99999997E-7 : f32
    %302 = arith.addf %296, %cst_155 : f32
    %303 = vector.broadcast %302 : f32 to vector<1x128xf32>
    %304 = arith.addf %301, %303 : vector<1x128xf32>
    %305 = arith.mulf %298, %281 : vector<1x128xf32>
    %306 = arith.mulf %280, %304 : vector<1x128xf32>
    %307 = arith.cmpf olt, %305, %306 : vector<1x128xf32>
    %308 = arith.select %307, %298, %280 : vector<1x128xi1>, vector<1x128xf32>
    %309 = arith.select %307, %304, %281 : vector<1x128xi1>, vector<1x128xf32>
    %c2_156 = arith.constant 2 : index
    %c2_157 = arith.constant 2 : index
    %310 = memref.load %arg4[%c2_156, %c2_157] : memref<4x5xf32, #tpu.memory_space<smem>>
    %311 = vector.broadcast %310 : f32 to vector<1x128xf32>
    %312 = arith.mulf %287, %311 : vector<1x128xf32>
    %313 = arith.addf %285, %312 : vector<1x128xf32>
    %c3_158 = arith.constant 3 : index
    %c0_159 = arith.constant 0 : index
    %c0_160 = arith.constant 0 : index
    %314 = vector.load %arg6[%c3_158, %c0_159, %c0_160] : memref<4x1x128xf32, #tpu.memory_space<vmem>>, vector<1x1x128xf32>
    %315 = vector.shape_cast %314 : vector<1x1x128xf32> to vector<1x128xf32>
    %c3_161 = arith.constant 3 : index
    %c2_162 = arith.constant 2 : index
    %316 = memref.load %arg1[%c3_161, %c2_162] : memref<4x5xf32, #tpu.memory_space<smem>>
    %317 = vector.broadcast %316 : f32 to vector<1x128xf32>
    %318 = arith.subf %315, %317 : vector<1x128xf32>
    %319 = arith.mulf %318, %318 : vector<1x128xf32>
    %c3_163 = arith.constant 3 : index
    %c2_164 = arith.constant 2 : index
    %320 = memref.load %arg2[%c3_163, %c2_164] : memref<4x5xf32, #tpu.memory_space<smem>>
    %321 = vector.broadcast %320 : f32 to vector<1x128xf32>
    %322 = arith.mulf %319, %321 : vector<1x128xf32>
    %323 = math.exp %322 : vector<1x128xf32>
    %c3_165 = arith.constant 3 : index
    %c2_166 = arith.constant 2 : index
    %324 = memref.load %arg3[%c3_165, %c2_166] : memref<4x5xf32, #tpu.memory_space<smem>>
    %cst_167 = arith.constant 9.99999997E-7 : f32
    %325 = vector.broadcast %cst_167 : f32 to vector<1x128xf32>
    %326 = arith.addf %323, %325 : vector<1x128xf32>
    %cst_168 = arith.constant 1.000000e+00 : f32
    %327 = arith.subf %cst_168, %324 : f32
    %328 = vector.broadcast %327 : f32 to vector<1x128xf32>
    %329 = arith.mulf %328, %323 : vector<1x128xf32>
    %cst_169 = arith.constant 9.99999997E-7 : f32
    %330 = arith.addf %324, %cst_169 : f32
    %331 = vector.broadcast %330 : f32 to vector<1x128xf32>
    %332 = arith.addf %329, %331 : vector<1x128xf32>
    %333 = arith.mulf %326, %309 : vector<1x128xf32>
    %334 = arith.mulf %308, %332 : vector<1x128xf32>
    %335 = arith.cmpf olt, %333, %334 : vector<1x128xf32>
    %336 = arith.select %335, %326, %308 : vector<1x128xi1>, vector<1x128xf32>
    %337 = arith.select %335, %332, %309 : vector<1x128xi1>, vector<1x128xf32>
    %c3_170 = arith.constant 3 : index
    %c2_171 = arith.constant 2 : index
    %338 = memref.load %arg4[%c3_170, %c2_171] : memref<4x5xf32, #tpu.memory_space<smem>>
    %339 = vector.broadcast %338 : f32 to vector<1x128xf32>
    %340 = arith.mulf %315, %339 : vector<1x128xf32>
    %341 = arith.addf %313, %340 : vector<1x128xf32>
    %c0_172 = arith.constant 0 : index
    %c2_173 = arith.constant 2 : index
    %342 = memref.load %arg5[%c0_172, %c2_173] : memref<1x5xf32, #tpu.memory_space<smem>>
    %343 = vector.broadcast %342 : f32 to vector<1x128xf32>
    %344 = arith.addf %341, %343 : vector<1x128xf32>
    %345 = arith.divf %336, %337 : vector<1x128xf32>
    %346 = arith.mulf %345, %344 : vector<1x128xf32>
    %347 = arith.addf %231, %346 : vector<1x128xf32>
    %348 = math.absf %345 : vector<1x128xf32>
    %349 = arith.addf %233, %348 : vector<1x128xf32>
    %cst_174 = arith.constant 0.000000e+00 : f32
    %350 = vector.broadcast %cst_174 : f32 to vector<1x128xf32>
    %c0_175 = arith.constant 0 : index
    %c0_176 = arith.constant 0 : index
    %c0_177 = arith.constant 0 : index
    %351 = vector.load %arg6[%c0_175, %c0_176, %c0_177] : memref<4x1x128xf32, #tpu.memory_space<vmem>>, vector<1x1x128xf32>
    %352 = vector.shape_cast %351 : vector<1x1x128xf32> to vector<1x128xf32>
    %c0_178 = arith.constant 0 : index
    %c3_179 = arith.constant 3 : index
    %353 = memref.load %arg1[%c0_178, %c3_179] : memref<4x5xf32, #tpu.memory_space<smem>>
    %354 = vector.broadcast %353 : f32 to vector<1x128xf32>
    %355 = arith.subf %352, %354 : vector<1x128xf32>
    %356 = arith.mulf %355, %355 : vector<1x128xf32>
    %c0_180 = arith.constant 0 : index
    %c3_181 = arith.constant 3 : index
    %357 = memref.load %arg2[%c0_180, %c3_181] : memref<4x5xf32, #tpu.memory_space<smem>>
    %358 = vector.broadcast %357 : f32 to vector<1x128xf32>
    %359 = arith.mulf %356, %358 : vector<1x128xf32>
    %360 = math.exp %359 : vector<1x128xf32>
    %c0_182 = arith.constant 0 : index
    %c3_183 = arith.constant 3 : index
    %361 = memref.load %arg3[%c0_182, %c3_183] : memref<4x5xf32, #tpu.memory_space<smem>>
    %cst_184 = arith.constant 9.99999997E-7 : f32
    %362 = vector.broadcast %cst_184 : f32 to vector<1x128xf32>
    %363 = arith.addf %360, %362 : vector<1x128xf32>
    %cst_185 = arith.constant 1.000000e+00 : f32
    %364 = arith.subf %cst_185, %361 : f32
    %365 = vector.broadcast %364 : f32 to vector<1x128xf32>
    %366 = arith.mulf %365, %360 : vector<1x128xf32>
    %cst_186 = arith.constant 9.99999997E-7 : f32
    %367 = arith.addf %361, %cst_186 : f32
    %368 = vector.broadcast %367 : f32 to vector<1x128xf32>
    %369 = arith.addf %366, %368 : vector<1x128xf32>
    %c0_187 = arith.constant 0 : index
    %c3_188 = arith.constant 3 : index
    %370 = memref.load %arg4[%c0_187, %c3_188] : memref<4x5xf32, #tpu.memory_space<smem>>
    %371 = vector.broadcast %370 : f32 to vector<1x128xf32>
    %372 = arith.mulf %352, %371 : vector<1x128xf32>
    %373 = arith.addf %350, %372 : vector<1x128xf32>
    %c1_189 = arith.constant 1 : index
    %c0_190 = arith.constant 0 : index
    %c0_191 = arith.constant 0 : index
    %374 = vector.load %arg6[%c1_189, %c0_190, %c0_191] : memref<4x1x128xf32, #tpu.memory_space<vmem>>, vector<1x1x128xf32>
    %375 = vector.shape_cast %374 : vector<1x1x128xf32> to vector<1x128xf32>
    %c1_192 = arith.constant 1 : index
    %c3_193 = arith.constant 3 : index
    %376 = memref.load %arg1[%c1_192, %c3_193] : memref<4x5xf32, #tpu.memory_space<smem>>
    %377 = vector.broadcast %376 : f32 to vector<1x128xf32>
    %378 = arith.subf %375, %377 : vector<1x128xf32>
    %379 = arith.mulf %378, %378 : vector<1x128xf32>
    %c1_194 = arith.constant 1 : index
    %c3_195 = arith.constant 3 : index
    %380 = memref.load %arg2[%c1_194, %c3_195] : memref<4x5xf32, #tpu.memory_space<smem>>
    %381 = vector.broadcast %380 : f32 to vector<1x128xf32>
    %382 = arith.mulf %379, %381 : vector<1x128xf32>
    %383 = math.exp %382 : vector<1x128xf32>
    %c1_196 = arith.constant 1 : index
    %c3_197 = arith.constant 3 : index
    %384 = memref.load %arg3[%c1_196, %c3_197] : memref<4x5xf32, #tpu.memory_space<smem>>
    %cst_198 = arith.constant 9.99999997E-7 : f32
    %385 = vector.broadcast %cst_198 : f32 to vector<1x128xf32>
    %386 = arith.addf %383, %385 : vector<1x128xf32>
    %cst_199 = arith.constant 1.000000e+00 : f32
    %387 = arith.subf %cst_199, %384 : f32
    %388 = vector.broadcast %387 : f32 to vector<1x128xf32>
    %389 = arith.mulf %388, %383 : vector<1x128xf32>
    %cst_200 = arith.constant 9.99999997E-7 : f32
    %390 = arith.addf %384, %cst_200 : f32
    %391 = vector.broadcast %390 : f32 to vector<1x128xf32>
    %392 = arith.addf %389, %391 : vector<1x128xf32>
    %393 = arith.mulf %386, %369 : vector<1x128xf32>
    %394 = arith.mulf %363, %392 : vector<1x128xf32>
    %395 = arith.cmpf olt, %393, %394 : vector<1x128xf32>
    %396 = arith.select %395, %386, %363 : vector<1x128xi1>, vector<1x128xf32>
    %397 = arith.select %395, %392, %369 : vector<1x128xi1>, vector<1x128xf32>
    %c1_201 = arith.constant 1 : index
    %c3_202 = arith.constant 3 : index
    %398 = memref.load %arg4[%c1_201, %c3_202] : memref<4x5xf32, #tpu.memory_space<smem>>
    %399 = vector.broadcast %398 : f32 to vector<1x128xf32>
    %400 = arith.mulf %375, %399 : vector<1x128xf32>
    %401 = arith.addf %373, %400 : vector<1x128xf32>
    %c2_203 = arith.constant 2 : index
    %c0_204 = arith.constant 0 : index
    %c0_205 = arith.constant 0 : index
    %402 = vector.load %arg6[%c2_203, %c0_204, %c0_205] : memref<4x1x128xf32, #tpu.memory_space<vmem>>, vector<1x1x128xf32>
    %403 = vector.shape_cast %402 : vector<1x1x128xf32> to vector<1x128xf32>
    %c2_206 = arith.constant 2 : index
    %c3_207 = arith.constant 3 : index
    %404 = memref.load %arg1[%c2_206, %c3_207] : memref<4x5xf32, #tpu.memory_space<smem>>
    %405 = vector.broadcast %404 : f32 to vector<1x128xf32>
    %406 = arith.subf %403, %405 : vector<1x128xf32>
    %407 = arith.mulf %406, %406 : vector<1x128xf32>
    %c2_208 = arith.constant 2 : index
    %c3_209 = arith.constant 3 : index
    %408 = memref.load %arg2[%c2_208, %c3_209] : memref<4x5xf32, #tpu.memory_space<smem>>
    %409 = vector.broadcast %408 : f32 to vector<1x128xf32>
    %410 = arith.mulf %407, %409 : vector<1x128xf32>
    %411 = math.exp %410 : vector<1x128xf32>
    %c2_210 = arith.constant 2 : index
    %c3_211 = arith.constant 3 : index
    %412 = memref.load %arg3[%c2_210, %c3_211] : memref<4x5xf32, #tpu.memory_space<smem>>
    %cst_212 = arith.constant 9.99999997E-7 : f32
    %413 = vector.broadcast %cst_212 : f32 to vector<1x128xf32>
    %414 = arith.addf %411, %413 : vector<1x128xf32>
    %cst_213 = arith.constant 1.000000e+00 : f32
    %415 = arith.subf %cst_213, %412 : f32
    %416 = vector.broadcast %415 : f32 to vector<1x128xf32>
    %417 = arith.mulf %416, %411 : vector<1x128xf32>
    %cst_214 = arith.constant 9.99999997E-7 : f32
    %418 = arith.addf %412, %cst_214 : f32
    %419 = vector.broadcast %418 : f32 to vector<1x128xf32>
    %420 = arith.addf %417, %419 : vector<1x128xf32>
    %421 = arith.mulf %414, %397 : vector<1x128xf32>
    %422 = arith.mulf %396, %420 : vector<1x128xf32>
    %423 = arith.cmpf olt, %421, %422 : vector<1x128xf32>
    %424 = arith.select %423, %414, %396 : vector<1x128xi1>, vector<1x128xf32>
    %425 = arith.select %423, %420, %397 : vector<1x128xi1>, vector<1x128xf32>
    %c2_215 = arith.constant 2 : index
    %c3_216 = arith.constant 3 : index
    %426 = memref.load %arg4[%c2_215, %c3_216] : memref<4x5xf32, #tpu.memory_space<smem>>
    %427 = vector.broadcast %426 : f32 to vector<1x128xf32>
    %428 = arith.mulf %403, %427 : vector<1x128xf32>
    %429 = arith.addf %401, %428 : vector<1x128xf32>
    %c3_217 = arith.constant 3 : index
    %c0_218 = arith.constant 0 : index
    %c0_219 = arith.constant 0 : index
    %430 = vector.load %arg6[%c3_217, %c0_218, %c0_219] : memref<4x1x128xf32, #tpu.memory_space<vmem>>, vector<1x1x128xf32>
    %431 = vector.shape_cast %430 : vector<1x1x128xf32> to vector<1x128xf32>
    %c3_220 = arith.constant 3 : index
    %c3_221 = arith.constant 3 : index
    %432 = memref.load %arg1[%c3_220, %c3_221] : memref<4x5xf32, #tpu.memory_space<smem>>
    %433 = vector.broadcast %432 : f32 to vector<1x128xf32>
    %434 = arith.subf %431, %433 : vector<1x128xf32>
    %435 = arith.mulf %434, %434 : vector<1x128xf32>
    %c3_222 = arith.constant 3 : index
    %c3_223 = arith.constant 3 : index
    %436 = memref.load %arg2[%c3_222, %c3_223] : memref<4x5xf32, #tpu.memory_space<smem>>
    %437 = vector.broadcast %436 : f32 to vector<1x128xf32>
    %438 = arith.mulf %435, %437 : vector<1x128xf32>
    %439 = math.exp %438 : vector<1x128xf32>
    %c3_224 = arith.constant 3 : index
    %c3_225 = arith.constant 3 : index
    %440 = memref.load %arg3[%c3_224, %c3_225] : memref<4x5xf32, #tpu.memory_space<smem>>
    %cst_226 = arith.constant 9.99999997E-7 : f32
    %441 = vector.broadcast %cst_226 : f32 to vector<1x128xf32>
    %442 = arith.addf %439, %441 : vector<1x128xf32>
    %cst_227 = arith.constant 1.000000e+00 : f32
    %443 = arith.subf %cst_227, %440 : f32
    %444 = vector.broadcast %443 : f32 to vector<1x128xf32>
    %445 = arith.mulf %444, %439 : vector<1x128xf32>
    %cst_228 = arith.constant 9.99999997E-7 : f32
    %446 = arith.addf %440, %cst_228 : f32
    %447 = vector.broadcast %446 : f32 to vector<1x128xf32>
    %448 = arith.addf %445, %447 : vector<1x128xf32>
    %449 = arith.mulf %442, %425 : vector<1x128xf32>
    %450 = arith.mulf %424, %448 : vector<1x128xf32>
    %451 = arith.cmpf olt, %449, %450 : vector<1x128xf32>
    %452 = arith.select %451, %442, %424 : vector<1x128xi1>, vector<1x128xf32>
    %453 = arith.select %451, %448, %425 : vector<1x128xi1>, vector<1x128xf32>
    %c3_229 = arith.constant 3 : index
    %c3_230 = arith.constant 3 : index
    %454 = memref.load %arg4[%c3_229, %c3_230] : memref<4x5xf32, #tpu.memory_space<smem>>
    %455 = vector.broadcast %454 : f32 to vector<1x128xf32>
    %456 = arith.mulf %431, %455 : vector<1x128xf32>
    %457 = arith.addf %429, %456 : vector<1x128xf32>
    %c0_231 = arith.constant 0 : index
    %c3_232 = arith.constant 3 : index
    %458 = memref.load %arg5[%c0_231, %c3_232] : memref<1x5xf32, #tpu.memory_space<smem>>
    %459 = vector.broadcast %458 : f32 to vector<1x128xf32>
    %460 = arith.addf %457, %459 : vector<1x128xf32>
    %461 = arith.divf %452, %453 : vector<1x128xf32>
    %462 = arith.mulf %461, %460 : vector<1x128xf32>
    %463 = arith.addf %347, %462 : vector<1x128xf32>
    %464 = math.absf %461 : vector<1x128xf32>
    %465 = arith.addf %349, %464 : vector<1x128xf32>
    %cst_233 = arith.constant 0.000000e+00 : f32
    %466 = vector.broadcast %cst_233 : f32 to vector<1x128xf32>
    %c0_234 = arith.constant 0 : index
    %c0_235 = arith.constant 0 : index
    %c0_236 = arith.constant 0 : index
    %467 = vector.load %arg6[%c0_234, %c0_235, %c0_236] : memref<4x1x128xf32, #tpu.memory_space<vmem>>, vector<1x1x128xf32>
    %468 = vector.shape_cast %467 : vector<1x1x128xf32> to vector<1x128xf32>
    %c0_237 = arith.constant 0 : index
    %c4 = arith.constant 4 : index
    %469 = memref.load %arg1[%c0_237, %c4] : memref<4x5xf32, #tpu.memory_space<smem>>
    %470 = vector.broadcast %469 : f32 to vector<1x128xf32>
    %471 = arith.subf %468, %470 : vector<1x128xf32>
    %472 = arith.mulf %471, %471 : vector<1x128xf32>
    %c0_238 = arith.constant 0 : index
    %c4_239 = arith.constant 4 : index
    %473 = memref.load %arg2[%c0_238, %c4_239] : memref<4x5xf32, #tpu.memory_space<smem>>
    %474 = vector.broadcast %473 : f32 to vector<1x128xf32>
    %475 = arith.mulf %472, %474 : vector<1x128xf32>
    %476 = math.exp %475 : vector<1x128xf32>
    %c0_240 = arith.constant 0 : index
    %c4_241 = arith.constant 4 : index
    %477 = memref.load %arg3[%c0_240, %c4_241] : memref<4x5xf32, #tpu.memory_space<smem>>
    %cst_242 = arith.constant 9.99999997E-7 : f32
    %478 = vector.broadcast %cst_242 : f32 to vector<1x128xf32>
    %479 = arith.addf %476, %478 : vector<1x128xf32>
    %cst_243 = arith.constant 1.000000e+00 : f32
    %480 = arith.subf %cst_243, %477 : f32
    %481 = vector.broadcast %480 : f32 to vector<1x128xf32>
    %482 = arith.mulf %481, %476 : vector<1x128xf32>
    %cst_244 = arith.constant 9.99999997E-7 : f32
    %483 = arith.addf %477, %cst_244 : f32
    %484 = vector.broadcast %483 : f32 to vector<1x128xf32>
    %485 = arith.addf %482, %484 : vector<1x128xf32>
    %c0_245 = arith.constant 0 : index
    %c4_246 = arith.constant 4 : index
    %486 = memref.load %arg4[%c0_245, %c4_246] : memref<4x5xf32, #tpu.memory_space<smem>>
    %487 = vector.broadcast %486 : f32 to vector<1x128xf32>
    %488 = arith.mulf %468, %487 : vector<1x128xf32>
    %489 = arith.addf %466, %488 : vector<1x128xf32>
    %c1_247 = arith.constant 1 : index
    %c0_248 = arith.constant 0 : index
    %c0_249 = arith.constant 0 : index
    %490 = vector.load %arg6[%c1_247, %c0_248, %c0_249] : memref<4x1x128xf32, #tpu.memory_space<vmem>>, vector<1x1x128xf32>
    %491 = vector.shape_cast %490 : vector<1x1x128xf32> to vector<1x128xf32>
    %c1_250 = arith.constant 1 : index
    %c4_251 = arith.constant 4 : index
    %492 = memref.load %arg1[%c1_250, %c4_251] : memref<4x5xf32, #tpu.memory_space<smem>>
    %493 = vector.broadcast %492 : f32 to vector<1x128xf32>
    %494 = arith.subf %491, %493 : vector<1x128xf32>
    %495 = arith.mulf %494, %494 : vector<1x128xf32>
    %c1_252 = arith.constant 1 : index
    %c4_253 = arith.constant 4 : index
    %496 = memref.load %arg2[%c1_252, %c4_253] : memref<4x5xf32, #tpu.memory_space<smem>>
    %497 = vector.broadcast %496 : f32 to vector<1x128xf32>
    %498 = arith.mulf %495, %497 : vector<1x128xf32>
    %499 = math.exp %498 : vector<1x128xf32>
    %c1_254 = arith.constant 1 : index
    %c4_255 = arith.constant 4 : index
    %500 = memref.load %arg3[%c1_254, %c4_255] : memref<4x5xf32, #tpu.memory_space<smem>>
    %cst_256 = arith.constant 9.99999997E-7 : f32
    %501 = vector.broadcast %cst_256 : f32 to vector<1x128xf32>
    %502 = arith.addf %499, %501 : vector<1x128xf32>
    %cst_257 = arith.constant 1.000000e+00 : f32
    %503 = arith.subf %cst_257, %500 : f32
    %504 = vector.broadcast %503 : f32 to vector<1x128xf32>
    %505 = arith.mulf %504, %499 : vector<1x128xf32>
    %cst_258 = arith.constant 9.99999997E-7 : f32
    %506 = arith.addf %500, %cst_258 : f32
    %507 = vector.broadcast %506 : f32 to vector<1x128xf32>
    %508 = arith.addf %505, %507 : vector<1x128xf32>
    %509 = arith.mulf %502, %485 : vector<1x128xf32>
    %510 = arith.mulf %479, %508 : vector<1x128xf32>
    %511 = arith.cmpf olt, %509, %510 : vector<1x128xf32>
    %512 = arith.select %511, %502, %479 : vector<1x128xi1>, vector<1x128xf32>
    %513 = arith.select %511, %508, %485 : vector<1x128xi1>, vector<1x128xf32>
    %c1_259 = arith.constant 1 : index
    %c4_260 = arith.constant 4 : index
    %514 = memref.load %arg4[%c1_259, %c4_260] : memref<4x5xf32, #tpu.memory_space<smem>>
    %515 = vector.broadcast %514 : f32 to vector<1x128xf32>
    %516 = arith.mulf %491, %515 : vector<1x128xf32>
    %517 = arith.addf %489, %516 : vector<1x128xf32>
    %c2_261 = arith.constant 2 : index
    %c0_262 = arith.constant 0 : index
    %c0_263 = arith.constant 0 : index
    %518 = vector.load %arg6[%c2_261, %c0_262, %c0_263] : memref<4x1x128xf32, #tpu.memory_space<vmem>>, vector<1x1x128xf32>
    %519 = vector.shape_cast %518 : vector<1x1x128xf32> to vector<1x128xf32>
    %c2_264 = arith.constant 2 : index
    %c4_265 = arith.constant 4 : index
    %520 = memref.load %arg1[%c2_264, %c4_265] : memref<4x5xf32, #tpu.memory_space<smem>>
    %521 = vector.broadcast %520 : f32 to vector<1x128xf32>
    %522 = arith.subf %519, %521 : vector<1x128xf32>
    %523 = arith.mulf %522, %522 : vector<1x128xf32>
    %c2_266 = arith.constant 2 : index
    %c4_267 = arith.constant 4 : index
    %524 = memref.load %arg2[%c2_266, %c4_267] : memref<4x5xf32, #tpu.memory_space<smem>>
    %525 = vector.broadcast %524 : f32 to vector<1x128xf32>
    %526 = arith.mulf %523, %525 : vector<1x128xf32>
    %527 = math.exp %526 : vector<1x128xf32>
    %c2_268 = arith.constant 2 : index
    %c4_269 = arith.constant 4 : index
    %528 = memref.load %arg3[%c2_268, %c4_269] : memref<4x5xf32, #tpu.memory_space<smem>>
    %cst_270 = arith.constant 9.99999997E-7 : f32
    %529 = vector.broadcast %cst_270 : f32 to vector<1x128xf32>
    %530 = arith.addf %527, %529 : vector<1x128xf32>
    %cst_271 = arith.constant 1.000000e+00 : f32
    %531 = arith.subf %cst_271, %528 : f32
    %532 = vector.broadcast %531 : f32 to vector<1x128xf32>
    %533 = arith.mulf %532, %527 : vector<1x128xf32>
    %cst_272 = arith.constant 9.99999997E-7 : f32
    %534 = arith.addf %528, %cst_272 : f32
    %535 = vector.broadcast %534 : f32 to vector<1x128xf32>
    %536 = arith.addf %533, %535 : vector<1x128xf32>
    %537 = arith.mulf %530, %513 : vector<1x128xf32>
    %538 = arith.mulf %512, %536 : vector<1x128xf32>
    %539 = arith.cmpf olt, %537, %538 : vector<1x128xf32>
    %540 = arith.select %539, %530, %512 : vector<1x128xi1>, vector<1x128xf32>
    %541 = arith.select %539, %536, %513 : vector<1x128xi1>, vector<1x128xf32>
    %c2_273 = arith.constant 2 : index
    %c4_274 = arith.constant 4 : index
    %542 = memref.load %arg4[%c2_273, %c4_274] : memref<4x5xf32, #tpu.memory_space<smem>>
    %543 = vector.broadcast %542 : f32 to vector<1x128xf32>
    %544 = arith.mulf %519, %543 : vector<1x128xf32>
    %545 = arith.addf %517, %544 : vector<1x128xf32>
    %c3_275 = arith.constant 3 : index
    %c0_276 = arith.constant 0 : index
    %c0_277 = arith.constant 0 : index
    %546 = vector.load %arg6[%c3_275, %c0_276, %c0_277] : memref<4x1x128xf32, #tpu.memory_space<vmem>>, vector<1x1x128xf32>
    %547 = vector.shape_cast %546 : vector<1x1x128xf32> to vector<1x128xf32>
    %c3_278 = arith.constant 3 : index
    %c4_279 = arith.constant 4 : index
    %548 = memref.load %arg1[%c3_278, %c4_279] : memref<4x5xf32, #tpu.memory_space<smem>>
    %549 = vector.broadcast %548 : f32 to vector<1x128xf32>
    %550 = arith.subf %547, %549 : vector<1x128xf32>
    %551 = arith.mulf %550, %550 : vector<1x128xf32>
    %c3_280 = arith.constant 3 : index
    %c4_281 = arith.constant 4 : index
    %552 = memref.load %arg2[%c3_280, %c4_281] : memref<4x5xf32, #tpu.memory_space<smem>>
    %553 = vector.broadcast %552 : f32 to vector<1x128xf32>
    %554 = arith.mulf %551, %553 : vector<1x128xf32>
    %555 = math.exp %554 : vector<1x128xf32>
    %c3_282 = arith.constant 3 : index
    %c4_283 = arith.constant 4 : index
    %556 = memref.load %arg3[%c3_282, %c4_283] : memref<4x5xf32, #tpu.memory_space<smem>>
    %cst_284 = arith.constant 9.99999997E-7 : f32
    %557 = vector.broadcast %cst_284 : f32 to vector<1x128xf32>
    %558 = arith.addf %555, %557 : vector<1x128xf32>
    %cst_285 = arith.constant 1.000000e+00 : f32
    %559 = arith.subf %cst_285, %556 : f32
    %560 = vector.broadcast %559 : f32 to vector<1x128xf32>
    %561 = arith.mulf %560, %555 : vector<1x128xf32>
    %cst_286 = arith.constant 9.99999997E-7 : f32
    %562 = arith.addf %556, %cst_286 : f32
    %563 = vector.broadcast %562 : f32 to vector<1x128xf32>
    %564 = arith.addf %561, %563 : vector<1x128xf32>
    %565 = arith.mulf %558, %541 : vector<1x128xf32>
    %566 = arith.mulf %540, %564 : vector<1x128xf32>
    %567 = arith.cmpf olt, %565, %566 : vector<1x128xf32>
    %568 = arith.select %567, %558, %540 : vector<1x128xi1>, vector<1x128xf32>
    %569 = arith.select %567, %564, %541 : vector<1x128xi1>, vector<1x128xf32>
    %c3_287 = arith.constant 3 : index
    %c4_288 = arith.constant 4 : index
    %570 = memref.load %arg4[%c3_287, %c4_288] : memref<4x5xf32, #tpu.memory_space<smem>>
    %571 = vector.broadcast %570 : f32 to vector<1x128xf32>
    %572 = arith.mulf %547, %571 : vector<1x128xf32>
    %573 = arith.addf %545, %572 : vector<1x128xf32>
    %c0_289 = arith.constant 0 : index
    %c4_290 = arith.constant 4 : index
    %574 = memref.load %arg5[%c0_289, %c4_290] : memref<1x5xf32, #tpu.memory_space<smem>>
    %575 = vector.broadcast %574 : f32 to vector<1x128xf32>
    %576 = arith.addf %573, %575 : vector<1x128xf32>
    %577 = arith.divf %568, %569 : vector<1x128xf32>
    %578 = arith.mulf %577, %576 : vector<1x128xf32>
    %579 = arith.addf %463, %578 : vector<1x128xf32>
    %580 = math.absf %577 : vector<1x128xf32>
    %581 = arith.addf %465, %580 : vector<1x128xf32>
    %cst_291 = arith.constant 9.99999996E-13 : f32
    %582 = vector.broadcast %cst_291 : f32 to vector<1x128xf32>
    %583 = arith.maximumf %581, %582 : vector<1x128xf32>
    %584 = arith.divf %579, %583 : vector<1x128xf32>
    %c0_292 = arith.constant 0 : index
    %c0_293 = arith.constant 0 : index
    %585 = vector.load %arg7[%c0_292, %c0_293] : memref<1x128xf32, #tpu.memory_space<vmem>>, vector<1x128xf32>
    tpu.vector_store %arg7[%c0_292, %c0_293], %584 {strides = array<i32>} : memref<1x128xf32, #tpu.memory_space<vmem>>, vector<1x128xf32>,
    return
  }
  func.func @transform_0(%arg0: i32) -> (i32, i32) {
    %c0_i32 = arith.constant 0 : i32
    %c0_i32_0 = arith.constant 0 : i32
    %c0_i32_1 = arith.constant 0 : i32
    return %c0_i32, %c0_i32_0 : i32, i32
  }
  func.func @transform_1(%arg0: i32) -> (i32, i32) {
    %c0_i32 = arith.constant 0 : i32
    %c0_i32_0 = arith.constant 0 : i32
    %c0_i32_1 = arith.constant 0 : i32
    return %c0_i32, %c0_i32_0 : i32, i32
  }
  func.func @transform_2(%arg0: i32) -> (i32, i32) {
    %c0_i32 = arith.constant 0 : i32
    %c0_i32_0 = arith.constant 0 : i32
    %c0_i32_1 = arith.constant 0 : i32
    return %c0_i32, %c0_i32_0 : i32, i32
  }
  func.func @transform_3(%arg0: i32) -> (i32, i32) {
    %c0_i32 = arith.constant 0 : i32
    %c0_i32_0 = arith.constant 0 : i32
    %c0_i32_1 = arith.constant 0 : i32
    return %c0_i32, %c0_i32_0 : i32, i32
  }
  func.func @transform_4(%arg0: i32) -> (i32, i32) {
    %c0_i32 = arith.constant 0 : i32
    %c0_i32_0 = arith.constant 0 : i32
    %c0_i32_1 = arith.constant 0 : i32
    return %c0_i32, %c0_i32_0 : i32, i32
  }
  func.func @transform_5(%arg0: i32) -> (i32, i32, i32) {
    %c0_i32 = arith.constant 0 : i32
    %c0_i32_0 = arith.constant 0 : i32
    %c0_i32_1 = arith.constant 0 : i32
    return %c0_i32, %arg0, %c0_i32_0 : i32, i32, i32
  }
  func.func @transform_6(%arg0: i32) -> (i32, i32) {
    %c0_i32 = arith.constant 0 : i32
    %c0_i32_0 = arith.constant 0 : i32
    return %arg0, %c0_i32 : i32, i32
  }
}

</mosaic_0001>

<llo_original>
// kernel: unfis_forward.1
$region0: #{unfis_forward.1}
  #allocation0 [shape = 'u32[]', space=smem, size = 0x4, offset = 0x4, fixed_abs, tag = 'smem constant byte address 0x4 - core index']
  #allocation1 [shape = 'u32[144,128]{1,0:T(1,128)}', space=vmem, size = 0x12000, scoped, tag = 'internal scratch']
  %s0 = inlined_call_operand.vmem [shape: f32[4,5], index: 0, kind: input, shape index: {}]
  %s1 = inlined_call_operand.vmem [shape: f32[4,5], index: 1, kind: input, shape index: {}]
  %s2 = inlined_call_operand.vmem [shape: f32[4,5], index: 2, kind: input, shape index: {}]
  %s3 = inlined_call_operand.vmem [shape: f32[4,5], index: 3, kind: input, shape index: {}]
  %s4 = inlined_call_operand.vmem [shape: f32[1,5], index: 4, kind: input, shape index: {}]
  %s5 = inlined_call_operand.vmem [shape: f32[4,1,128], index: 5, kind: input, shape index: {}]
  %s6 = inlined_call_operand.vmem [shape: f32[1,128], index: 6, kind: output, shape index: {}]
  %s7 = sld [smem:[#allocation0]]
  $region54: #{unfis_forward.1} parent=0
    _
  %s9 = ssub.s32 1, %s7
  %s10 = scalar_select 0, %s9, %s7
  $region1: #{unfis_forward.1} parent=0
    #allocation2 [shape = 'u8[2048]{0}', space=smem, size = 0x800, scoped, tag = 'input window, operand 0, single buffered']
    #allocation3 [shape = 's32[1]{0}', space=sflag, size = 0x4, scoped, tag = 'scoped memory for unfis_forward.1']
    #allocation4 [shape = 'u8[2048]{0}', space=smem, size = 0x800, scoped, tag = 'input window, operand 1, single buffered']
    #allocation5 [shape = 's32[1]{0}', space=sflag, size = 0x4, scoped, tag = 'scoped memory for unfis_forward.1']
    #allocation6 [shape = 'u8[2048]{0}', space=smem, size = 0x800, scoped, tag = 'input window, operand 2, single buffered']
    #allocation7 [shape = 'u8[2048]{0}', space=smem, size = 0x800, scoped, tag = 'input window, operand 3, single buffered']
    #allocation8 [shape = 's32[1]{0}', space=sflag, size = 0x4, scoped, tag = 'scoped memory for unfis_forward.1']
    #allocation9 [shape = 'u8[512]{0}', space=smem, size = 0x200, scoped, tag = 'input window, operand 4, single buffered']
    %11 = vsyncpa [#allocation3], 0
    %12 = vsyncpa [#allocation5], 0
    %13 = vsyncpa [#allocation8], 0
    // Predicated region
    $region2: #{unfis_forward.1} parent=1 // pred_check
      _
    $region3: #{unfis_forward.1} parent=1 // pred_check_branch
      %15 = sbr.rel (0) target = $region5
    $region4: #{unfis_forward.1} parent=1 // pred_region
      %s17 = ssub.s32 64, 64
      %18 = vsyncadd [#allocation3], %s17
      %s20 = sshll.u32 %s0, 4
      %s21 = int_to_ptr.vmem [resolvable:$true] %s20
      %23 = dma.vmem_to_smem %s21, 64, [#allocation2], [#allocation3]
    $region5: #{unfis_forward.1} parent=1 // pred_fallthru
      _
    // Predicated region
    $region6: #{unfis_forward.1} parent=1 // pred_check
      _
    $region7: #{unfis_forward.1} parent=1 // pred_check_branch
      %25 = sbr.rel (0) target = $region9
    $region8: #{unfis_forward.1} parent=1 // pred_region
      %s27 = ssub.s32 64, 64
      %28 = vsyncadd [#allocation5], %s27
      %s30 = sshll.u32 %s1, 4
      %s31 = int_to_ptr.vmem [resolvable:$true] %s30
      %33 = dma.vmem_to_smem %s31, 64, [#allocation4], [#allocation5]
    $region9: #{unfis_forward.1} parent=1 // pred_fallthru
      _
    // Predicated region
    $region10: #{unfis_forward.1} parent=1 // pred_check
      _
    $region11: #{unfis_forward.1} parent=1 // pred_check_branch
      %35 = sbr.rel (0) target = $region13
    $region12: #{unfis_forward.1} parent=1 // pred_region
      %s37 = ssub.s32 64, 64
      %38 = vsyncadd [#allocation5], %s37
      %s40 = sshll.u32 %s2, 4
      %s41 = int_to_ptr.vmem [resolvable:$true] %s40
      %43 = dma.vmem_to_smem %s41, 64, [#allocation6], [#allocation5]
    $region13: #{unfis_forward.1} parent=1 // pred_fallthru
      _
    // Predicated region
    $region14: #{unfis_forward.1} parent=1 // pred_check
      _
    $region15: #{unfis_forward.1} parent=1 // pred_check_branch
      %45 = sbr.rel (0) target = $region17
    $region16: #{unfis_forward.1} parent=1 // pred_region
      %s47 = ssub.s32 64, 64
      %48 = vsyncadd [#allocation8], %s47
      %s50 = sshll.u32 %s3, 4
      %s51 = int_to_ptr.vmem [resolvable:$true] %s50
      %53 = dma.vmem_to_smem %s51, 64, [#allocation7], [#allocation8]
    $region17: #{unfis_forward.1} parent=1 // pred_fallthru
      _
    // Predicated region
    $region18: #{unfis_forward.1} parent=1 // pred_check
      _
    $region19: #{unfis_forward.1} parent=1 // pred_check_branch
      %55 = sbr.rel (0) target = $region21
    $region20: #{unfis_forward.1} parent=1 // pred_region
      %s57 = ssub.s32 16, 16
      %58 = vsyncadd [#allocation8], %s57
      %s60 = sshll.u32 %s4, 4
      %s61 = int_to_ptr.vmem [resolvable:$true] %s60
      %63 = dma.vmem_to_smem %s61, 16, [#allocation9], [#allocation8]
    $region21: #{unfis_forward.1} parent=1 // pred_fallthru
      _
    // Predicated region
    $region22: #{unfis_forward.1} parent=1 // pred_check
      _
    $region23: #{unfis_forward.1} parent=1 // pred_check_branch
      %65 = sbr.rel (0) target = $region25
    $region24: #{unfis_forward.1} parent=1 // pred_region
      _
    $region25: #{unfis_forward.1} parent=1 // pred_fallthru
      _
    // Predicated region
    $region26: #{unfis_forward.1} parent=1 // pred_check
      _
    $region27: #{unfis_forward.1} parent=1 // pred_check_branch
      %67 = sbr.rel (0) target = $region29
    $region28: #{unfis_forward.1} parent=1 // pred_region
      %68 = dma.done [#allocation3], 64
    $region29: #{unfis_forward.1} parent=1 // pred_fallthru
      _
    // Predicated region
    $region30: #{unfis_forward.1} parent=1 // pred_check
      _
    $region31: #{unfis_forward.1} parent=1 // pred_check_branch
      %70 = sbr.rel (0) target = $region33
    $region32: #{unfis_forward.1} parent=1 // pred_region
      %71 = dma.done [#allocation5], 64
    $region33: #{unfis_forward.1} parent=1 // pred_fallthru
      _
    // Predicated region
    $region34: #{unfis_forward.1} parent=1 // pred_check
      _
    $region35: #{unfis_forward.1} parent=1 // pred_check_branch
      %73 = sbr.rel (0) target = $region37
    $region36: #{unfis_forward.1} parent=1 // pred_region
      %74 = dma.done [#allocation5], 64
    $region37: #{unfis_forward.1} parent=1 // pred_fallthru
      _
    // Predicated region
    $region38: #{unfis_forward.1} parent=1 // pred_check
      _
    $region39: #{unfis_forward.1} parent=1 // pred_check_branch
      %76 = sbr.rel (0) target = $region41
    $region40: #{unfis_forward.1} parent=1 // pred_region
      %77 = dma.done [#allocation8], 64
    $region41: #{unfis_forward.1} parent=1 // pred_fallthru
      _
    // Predicated region
    $region42: #{unfis_forward.1} parent=1 // pred_check
      _
    $region43: #{unfis_forward.1} parent=1 // pred_check_branch
      %79 = sbr.rel (0) target = $region45
    $region44: #{unfis_forward.1} parent=1 // pred_region
      %80 = dma.done [#allocation8], 16
    $region45: #{unfis_forward.1} parent=1 // pred_fallthru
      _
    %81 = sfence
    %v82 = vld [vmem:[%s5] sm:$0x1]
    %s83 = sld [smem:[#allocation2]]
    %v84 = vstv %s83
    %v85 = vsub.f32 %v82, %v84
    %v86 = vmul.f32 %v85, %v85
    %s87 = sld [smem:[#allocation4]]
    %v88 = vstv %s87
    %v89 = vmul.f32 %v86, %v88
    %v90 = vmul.f32 %v89, 1.442695
    %v91 = vpow.pop %v90
    %s92 = sld [smem:[#allocation6]]
    %v93 = vadd.f32 %v91, 1e-06
    %s94 = ssub.f32 1.0, %s92
    %v95 = vstv %s94
    %v96 = vmul.f32 %v95, %v91
    %s97 = sadd.f32 %s92, 1e-06
    %v98 = vstv %s97
    %v99 = vadd.f32 %v96, %v98
    %s100 = sld [smem:[#allocation7]]
    %v101 = vstv %s100
    %v102 = vmul.f32 %v82, %v101
    %v103 = vadd.f32 %v102, 0.0
    %s104 = scalar_lea.vmem %s5, 1
    %v105 = vld [vmem:[%s104] sm:$0x1]
    %s106 = sld [smem:[#allocation2 + $0x80]]
    %v107 = vstv %s106
    %v108 = vsub.f32 %v105, %v107
    %v109 = vmul.f32 %v108, %v108
    %s110 = sld [smem:[#allocation4 + $0x80]]
    %v111 = vstv %s110
    %v112 = vmul.f32 %v109, %v111
    %v113 = vmul.f32 %v112, 1.442695
    %v114 = vpow.pop %v113
    %s115 = sld [smem:[#allocation6 + $0x80]]
    %v116 = vadd.f32 %v114, 1e-06
    %s117 = ssub.f32 1.0, %s115
    %v118 = vstv %s117
    %v119 = vmul.f32 %v118, %v114
    %s120 = sadd.f32 %s115, 1e-06
    %v121 = vstv %s120
    %v122 = vadd.f32 %v119, %v121
    %v123 = vmul.f32 %v116, %v99
    %v124 = vmul.f32 %v93, %v122
    %vm125 = vcmp.lt.f32.partialorder %v123, %v124
    %v126 = vsel %vm125, %v116, %v93
    %v127 = vsel %vm125, %v122, %v99
    %s128 = sld [smem:[#allocation7 + $0x80]]
    %v129 = vstv %s128
    %v130 = vmul.f32 %v105, %v129
    %v131 = vadd.f32 %v103, %v130
    %s132 = scalar_lea.vmem %s5, 2
    %v133 = vld [vmem:[%s132] sm:$0x1]
    %s134 = sld [smem:[#allocation2 + $0x100]]
    %v135 = vstv %s134
    %v136 = vsub.f32 %v133, %v135
    %v137 = vmul.f32 %v136, %v136
    %s138 = sld [smem:[#allocation4 + $0x100]]
    %v139 = vstv %s138
    %v140 = vmul.f32 %v137, %v139
    %v141 = vmul.f32 %v140, 1.442695
    %v142 = vpow.pop %v141
    %s143 = sld [smem:[#allocation6 + $0x100]]
    %v144 = vadd.f32 %v142, 1e-06
    %s145 = ssub.f32 1.0, %s143
    %v146 = vstv %s145
    %v147 = vmul.f32 %v146, %v142
    %s148 = sadd.f32 %s143, 1e-06
    %v149 = vstv %s148
    %v150 = vadd.f32 %v147, %v149
    %v151 = vmul.f32 %v144, %v127
    %v152 = vmul.f32 %v126, %v150
    %vm153 = vcmp.lt.f32.partialorder %v151, %v152
    %v154 = vsel %vm153, %v144, %v126
    %v155 = vsel %vm153, %v150, %v127
    %s156 = sld [smem:[#allocation7 + $0x100]]
    %v157 = vstv %s156
    %v158 = vmul.f32 %v133, %v157
    %v159 = vadd.f32 %v131, %v158
    %s160 = scalar_lea.vmem %s5, 3
    %v161 = vld [vmem:[%s160] sm:$0x1]
    %s162 = sld [smem:[#allocation2 + $0x180]]
    %v163 = vstv %s162
    %v164 = vsub.f32 %v161, %v163
    %v165 = vmul.f32 %v164, %v164
    %s166 = sld [smem:[#allocation4 + $0x180]]
    %v167 = vstv %s166
    %v168 = vmul.f32 %v165, %v167
    %v169 = vmul.f32 %v168, 1.442695
    %v170 = vpow.pop %v169
    %s171 = sld [smem:[#allocation6 + $0x180]]
    %v172 = vadd.f32 %v170, 1e-06
    %s173 = ssub.f32 1.0, %s171
    %v174 = vstv %s173
    %v175 = vmul.f32 %v174, %v170
    %s176 = sadd.f32 %s171, 1e-06
    %v177 = vstv %s176
    %v178 = vadd.f32 %v175, %v177
    %v179 = vmul.f32 %v172, %v155
    %v180 = vmul.f32 %v154, %v178
    %vm181 = vcmp.lt.f32.partialorder %v179, %v180
    %v182 = vsel %vm181, %v172, %v154
    %v183 = vsel %vm181, %v178, %v155
    %s184 = sld [smem:[#allocation7 + $0x180]]
    %v185 = vstv %s184
    %v186 = vmul.f32 %v161, %v185
    %v187 = vadd.f32 %v159, %v186
    %s188 = sld [smem:[#allocation9]]
    %v189 = vstv %s188
    %v190 = vadd.f32 %v187, %v189
    %v191 = vrcp.pop %v183
    %v192 = vmul.f32 %v182, %v191
    %v193 = vmul.f32 %v192, %v190
    %v194 = vadd.f32 %v193, 0.0
    %v195 = vand.u32 2147483647, %v192
    %v196 = vadd.f32 %v195, 0.0
    %s197 = sld [smem:[#allocation2 + $0x1]]
    %v198 = vstv %s197
    %v199 = vsub.f32 %v82, %v198
    %v200 = vmul.f32 %v199, %v199
    %s201 = sld [smem:[#allocation4 + $0x1]]
    %v202 = vstv %s201
    %v203 = vmul.f32 %v200, %v202
    %v204 = vmul.f32 %v203, 1.442695
    %v205 = vpow.pop %v204
    %s206 = sld [smem:[#allocation6 + $0x1]]
    %v207 = vadd.f32 %v205, 1e-06
    %s208 = ssub.f32 1.0, %s206
    %v209 = vstv %s208
    %v210 = vmul.f32 %v209, %v205
    %s211 = sadd.f32 %s206, 1e-06
    %v212 = vstv %s211
    %v213 = vadd.f32 %v210, %v212
    %s214 = sld [smem:[#allocation7 + $0x1]]
    %v215 = vstv %s214
    %v216 = vmul.f32 %v82, %v215
    %v217 = vadd.f32 %v216, 0.0
    %s218 = sld [smem:[#allocation2 + $0x81]]
    %v219 = vstv %s218
    %v220 = vsub.f32 %v105, %v219
    %v221 = vmul.f32 %v220, %v220
    %s222 = sld [smem:[#allocation4 + $0x81]]
    %v223 = vstv %s222
    %v224 = vmul.f32 %v221, %v223
    %v225 = vmul.f32 %v224, 1.442695
    %v226 = vpow.pop %v225
    %s227 = sld [smem:[#allocation6 + $0x81]]
    %v228 = vadd.f32 %v226, 1e-06
    %s229 = ssub.f32 1.0, %s227
    %v230 = vstv %s229
    %v231 = vmul.f32 %v230, %v226
    %s232 = sadd.f32 %s227, 1e-06
    %v233 = vstv %s232
    %v234 = vadd.f32 %v231, %v233
    %v235 = vmul.f32 %v228, %v213
    %v236 = vmul.f32 %v207, %v234
    %vm237 = vcmp.lt.f32.partialorder %v235, %v236
    %v238 = vsel %vm237, %v228, %v207
    %v239 = vsel %vm237, %v234, %v213
    %s240 = sld [smem:[#allocation7 + $0x81]]
    %v241 = vstv %s240
    %v242 = vmul.f32 %v105, %v241
    %v243 = vadd.f32 %v217, %v242
    %s244 = sld [smem:[#allocation2 + $0x101]]
    %v245 = vstv %s244
    %v246 = vsub.f32 %v133, %v245
    %v247 = vmul.f32 %v246, %v246
    %s248 = sld [smem:[#allocation4 + $0x101]]
    %v249 = vstv %s248
    %v250 = vmul.f32 %v247, %v249
    %v251 = vmul.f32 %v250, 1.442695
    %v252 = vpow.pop %v251
    %s253 = sld [smem:[#allocation6 + $0x101]]
    %v254 = vadd.f32 %v252, 1e-06
    %s255 = ssub.f32 1.0, %s253
    %v256 = vstv %s255
    %v257 = vmul.f32 %v256, %v252
    %s258 = sadd.f32 %s253, 1e-06
    %v259 = vstv %s258
    %v260 = vadd.f32 %v257, %v259
    %v261 = vmul.f32 %v254, %v239
    %v262 = vmul.f32 %v238, %v260
    %vm263 = vcmp.lt.f32.partialorder %v261, %v262
    %v264 = vsel %vm263, %v254, %v238
    %v265 = vsel %vm263, %v260, %v239
    %s266 = sld [smem:[#allocation7 + $0x101]]
    %v267 = vstv %s266
    %v268 = vmul.f32 %v133, %v267
    %v269 = vadd.f32 %v243, %v268
    %s270 = sld [smem:[#allocation2 + $0x181]]
    %v271 = vstv %s270
    %v272 = vsub.f32 %v161, %v271
    %v273 = vmul.f32 %v272, %v272
    %s274 = sld [smem:[#allocation4 + $0x181]]
    %v275 = vstv %s274
    %v276 = vmul.f32 %v273, %v275
    %v277 = vmul.f32 %v276, 1.442695
    %v278 = vpow.pop %v277
    %s279 = sld [smem:[#allocation6 + $0x181]]
    %v280 = vadd.f32 %v278, 1e-06
    %s281 = ssub.f32 1.0, %s279
    %v282 = vstv %s281
    %v283 = vmul.f32 %v282, %v278
    %s284 = sadd.f32 %s279, 1e-06
    %v285 = vstv %s284
    %v286 = vadd.f32 %v283, %v285
    %v287 = vmul.f32 %v280, %v265
    %v288 = vmul.f32 %v264, %v286
    %vm289 = vcmp.lt.f32.partialorder %v287, %v288
    %v290 = vsel %vm289, %v280, %v264
    %v291 = vsel %vm289, %v286, %v265
    %s292 = sld [smem:[#allocation7 + $0x181]]
    %v293 = vstv %s292
    %v294 = vmul.f32 %v161, %v293
    %v295 = vadd.f32 %v269, %v294
    %s296 = sld [smem:[#allocation9 + $0x1]]
    %v297 = vstv %s296
    %v298 = vadd.f32 %v295, %v297
    %v299 = vrcp.pop %v291
    %v300 = vmul.f32 %v290, %v299
    %v301 = vmul.f32 %v300, %v298
    %v302 = vadd.f32 %v194, %v301
    %v303 = vand.u32 2147483647, %v300
    %v304 = vadd.f32 %v196, %v303
    %s305 = sld [smem:[#allocation2 + $0x2]]
    %v306 = vstv %s305
    %v307 = vsub.f32 %v82, %v306
    %v308 = vmul.f32 %v307, %v307
    %s309 = sld [smem:[#allocation4 + $0x2]]
    %v310 = vstv %s309
    %v311 = vmul.f32 %v308, %v310
    %v312 = vmul.f32 %v311, 1.442695
    %v313 = vpow.pop %v312
    %s314 = sld [smem:[#allocation6 + $0x2]]
    %v315 = vadd.f32 %v313, 1e-06
    %s316 = ssub.f32 1.0, %s314
    %v317 = vstv %s316
    %v318 = vmul.f32 %v317, %v313
    %s319 = sadd.f32 %s314, 1e-06
    %v320 = vstv %s319
    %v321 = vadd.f32 %v318, %v320
    %s322 = sld [smem:[#allocation7 + $0x2]]
    %v323 = vstv %s322
    %v324 = vmul.f32 %v82, %v323
    %v325 = vadd.f32 %v324, 0.0
    %s326 = sld [smem:[#allocation2 + $0x82]]
    %v327 = vstv %s326
    %v328 = vsub.f32 %v105, %v327
    %v329 = vmul.f32 %v328, %v328
    %s330 = sld [smem:[#allocation4 + $0x82]]
    %v331 = vstv %s330
    %v332 = vmul.f32 %v329, %v331
    %v333 = vmul.f32 %v332, 1.442695
    %v334 = vpow.pop %v333
    %s335 = sld [smem:[#allocation6 + $0x82]]
    %v336 = vadd.f32 %v334, 1e-06
    %s337 = ssub.f32 1.0, %s335
    %v338 = vstv %s337
    %v339 = vmul.f32 %v338, %v334
    %s340 = sadd.f32 %s335, 1e-06
    %v341 = vstv %s340
    %v342 = vadd.f32 %v339, %v341
    %v343 = vmul.f32 %v336, %v321
    %v344 = vmul.f32 %v315, %v342
    %vm345 = vcmp.lt.f32.partialorder %v343, %v344
    %v346 = vsel %vm345, %v336, %v315
    %v347 = vsel %vm345, %v342, %v321
    %s348 = sld [smem:[#allocation7 + $0x82]]
    %v349 = vstv %s348
    %v350 = vmul.f32 %v105, %v349
    %v351 = vadd.f32 %v325, %v350
    %s352 = sld [smem:[#allocation2 + $0x102]]
    %v353 = vstv %s352
    %v354 = vsub.f32 %v133, %v353
    %v355 = vmul.f32 %v354, %v354
    %s356 = sld [smem:[#allocation4 + $0x102]]
    %v357 = vstv %s356
    %v358 = vmul.f32 %v355, %v357
    %v359 = vmul.f32 %v358, 1.442695
    %v360 = vpow.pop %v359
    %s361 = sld [smem:[#allocation6 + $0x102]]
    %v362 = vadd.f32 %v360, 1e-06
    %s363 = ssub.f32 1.0, %s361
    %v364 = vstv %s363
    %v365 = vmul.f32 %v364, %v360
    %s366 = sadd.f32 %s361, 1e-06
    %v367 = vstv %s366
    %v368 = vadd.f32 %v365, %v367
    %v369 = vmul.f32 %v362, %v347
    %v370 = vmul.f32 %v346, %v368
    %vm371 = vcmp.lt.f32.partialorder %v369, %v370
    %v372 = vsel %vm371, %v362, %v346
    %v373 = vsel %vm371, %v368, %v347
    %s374 = sld [smem:[#allocation7 + $0x102]]
    %v375 = vstv %s374
    %v376 = vmul.f32 %v133, %v375
    %v377 = vadd.f32 %v351, %v376
    %s378 = sld [smem:[#allocation2 + $0x182]]
    %v379 = vstv %s378
    %v380 = vsub.f32 %v161, %v379
    %v381 = vmul.f32 %v380, %v380
    %s382 = sld [smem:[#allocation4 + $0x182]]
    %v383 = vstv %s382
    %v384 = vmul.f32 %v381, %v383
    %v385 = vmul.f32 %v384, 1.442695
    %v386 = vpow.pop %v385
    %s387 = sld [smem:[#allocation6 + $0x182]]
    %v388 = vadd.f32 %v386, 1e-06
    %s389 = ssub.f32 1.0, %s387
    %v390 = vstv %s389
    %v391 = vmul.f32 %v390, %v386
    %s392 = sadd.f32 %s387, 1e-06
    %v393 = vstv %s392
    %v394 = vadd.f32 %v391, %v393
    %v395 = vmul.f32 %v388, %v373
    %v396 = vmul.f32 %v372, %v394
    %vm397 = vcmp.lt.f32.partialorder %v395, %v396
    %v398 = vsel %vm397, %v388, %v372
    %v399 = vsel %vm397, %v394, %v373
    %s400 = sld [smem:[#allocation7 + $0x182]]
    %v401 = vstv %s400
    %v402 = vmul.f32 %v161, %v401
    %v403 = vadd.f32 %v377, %v402
    %s404 = sld [smem:[#allocation9 + $0x2]]
    %v405 = vstv %s404
    %v406 = vadd.f32 %v403, %v405
    %v407 = vrcp.pop %v399
    %v408 = vmul.f32 %v398, %v407
    %v409 = vmul.f32 %v408, %v406
    %v410 = vadd.f32 %v302, %v409
    %v411 = vand.u32 2147483647, %v408
    %v412 = vadd.f32 %v304, %v411
    %s413 = sld [smem:[#allocation2 + $0x3]]
    %v414 = vstv %s413
    %v415 = vsub.f32 %v82, %v414
    %v416 = vmul.f32 %v415, %v415
    %s417 = sld [smem:[#allocation4 + $0x3]]
    %v418 = vstv %s417
    %v419 = vmul.f32 %v416, %v418
    %v420 = vmul.f32 %v419, 1.442695
    %v421 = vpow.pop %v420
    %s422 = sld [smem:[#allocation6 + $0x3]]
    %v423 = vadd.f32 %v421, 1e-06
    %s424 = ssub.f32 1.0, %s422
    %v425 = vstv %s424
    %v426 = vmul.f32 %v425, %v421
    %s427 = sadd.f32 %s422, 1e-06
    %v428 = vstv %s427
    %v429 = vadd.f32 %v426, %v428
    %s430 = sld [smem:[#allocation7 + $0x3]]
    %v431 = vstv %s430
    %v432 = vmul.f32 %v82, %v431
    %v433 = vadd.f32 %v432, 0.0
    %s434 = sld [smem:[#allocation2 + $0x83]]
    %v435 = vstv %s434
    %v436 = vsub.f32 %v105, %v435
    %v437 = vmul.f32 %v436, %v436
    %s438 = sld [smem:[#allocation4 + $0x83]]
    %v439 = vstv %s438
    %v440 = vmul.f32 %v437, %v439
    %v441 = vmul.f32 %v440, 1.442695
    %v442 = vpow.pop %v441
    %s443 = sld [smem:[#allocation6 + $0x83]]
    %v444 = vadd.f32 %v442, 1e-06
    %s445 = ssub.f32 1.0, %s443
    %v446 = vstv %s445
    %v447 = vmul.f32 %v446, %v442
    %s448 = sadd.f32 %s443, 1e-06
    %v449 = vstv %s448
    %v450 = vadd.f32 %v447, %v449
    %v451 = vmul.f32 %v444, %v429
    %v452 = vmul.f32 %v423, %v450
    %vm453 = vcmp.lt.f32.partialorder %v451, %v452
    %v454 = vsel %vm453, %v444, %v423
    %v455 = vsel %vm453, %v450, %v429
    %s456 = sld [smem:[#allocation7 + $0x83]]
    %v457 = vstv %s456
    %v458 = vmul.f32 %v105, %v457
    %v459 = vadd.f32 %v433, %v458
    %s460 = sld [smem:[#allocation2 + $0x103]]
    %v461 = vstv %s460
    %v462 = vsub.f32 %v133, %v461
    %v463 = vmul.f32 %v462, %v462
    %s464 = sld [smem:[#allocation4 + $0x103]]
    %v465 = vstv %s464
    %v466 = vmul.f32 %v463, %v465
    %v467 = vmul.f32 %v466, 1.442695
    %v468 = vpow.pop %v467
    %s469 = sld [smem:[#allocation6 + $0x103]]
    %v470 = vadd.f32 %v468, 1e-06
    %s471 = ssub.f32 1.0, %s469
    %v472 = vstv %s471
    %v473 = vmul.f32 %v472, %v468
    %s474 = sadd.f32 %s469, 1e-06
    %v475 = vstv %s474
    %v476 = vadd.f32 %v473, %v475
    %v477 = vmul.f32 %v470, %v455
    %v478 = vmul.f32 %v454, %v476
    %vm479 = vcmp.lt.f32.partialorder %v477, %v478
    %v480 = vsel %vm479, %v470, %v454
    %v481 = vsel %vm479, %v476, %v455
    %s482 = sld [smem:[#allocation7 + $0x103]]
    %v483 = vstv %s482
    %v484 = vmul.f32 %v133, %v483
    %v485 = vadd.f32 %v459, %v484
    %s486 = sld [smem:[#allocation2 + $0x183]]
    %v487 = vstv %s486
    %v488 = vsub.f32 %v161, %v487
    %v489 = vmul.f32 %v488, %v488
    %s490 = sld [smem:[#allocation4 + $0x183]]
    %v491 = vstv %s490
    %v492 = vmul.f32 %v489, %v491
    %v493 = vmul.f32 %v492, 1.442695
    %v494 = vpow.pop %v493
    %s495 = sld [smem:[#allocation6 + $0x183]]
    %v496 = vadd.f32 %v494, 1e-06
    %s497 = ssub.f32 1.0, %s495
    %v498 = vstv %s497
    %v499 = vmul.f32 %v498, %v494
    %s500 = sadd.f32 %s495, 1e-06
    %v501 = vstv %s500
    %v502 = vadd.f32 %v499, %v501
    %v503 = vmul.f32 %v496, %v481
    %v504 = vmul.f32 %v480, %v502
    %vm505 = vcmp.lt.f32.partialorder %v503, %v504
    %v506 = vsel %vm505, %v496, %v480
    %v507 = vsel %vm505, %v502, %v481
    %s508 = sld [smem:[#allocation7 + $0x183]]
    %v509 = vstv %s508
    %v510 = vmul.f32 %v161, %v509
    %v511 = vadd.f32 %v485, %v510
    %s512 = sld [smem:[#allocation9 + $0x3]]
    %v513 = vstv %s512
    %v514 = vadd.f32 %v511, %v513
    %v515 = vrcp.pop %v507
    %v516 = vmul.f32 %v506, %v515
    %v517 = vmul.f32 %v516, %v514
    %v518 = vadd.f32 %v410, %v517
    %v519 = vand.u32 2147483647, %v516
    %v520 = vadd.f32 %v412, %v519
    %s521 = sld [smem:[#allocation2 + $0x4]]
    %v522 = vstv %s521
    %v523 = vsub.f32 %v82, %v522
    %v524 = vmul.f32 %v523, %v523
    %s525 = sld [smem:[#allocation4 + $0x4]]
    %v526 = vstv %s525
    %v527 = vmul.f32 %v524, %v526
    %v528 = vmul.f32 %v527, 1.442695
    %v529 = vpow.pop %v528
    %s530 = sld [smem:[#allocation6 + $0x4]]
    %v531 = vadd.f32 %v529, 1e-06
    %s532 = ssub.f32 1.0, %s530
    %v533 = vstv %s532
    %v534 = vmul.f32 %v533, %v529
    %s535 = sadd.f32 %s530, 1e-06
    %v536 = vstv %s535
    %v537 = vadd.f32 %v534, %v536
    %s538 = sld [smem:[#allocation7 + $0x4]]
    %v539 = vstv %s538
    %v540 = vmul.f32 %v82, %v539
    %v541 = vadd.f32 %v540, 0.0
    %s542 = sld [smem:[#allocation2 + $0x84]]
    %v543 = vstv %s542
    %v544 = vsub.f32 %v105, %v543
    %v545 = vmul.f32 %v544, %v544
    %s546 = sld [smem:[#allocation4 + $0x84]]
    %v547 = vstv %s546
    %v548 = vmul.f32 %v545, %v547
    %v549 = vmul.f32 %v548, 1.442695
    %v550 = vpow.pop %v549
    %s551 = sld [smem:[#allocation6 + $0x84]]
    %v552 = vadd.f32 %v550, 1e-06
    %s553 = ssub.f32 1.0, %s551
    %v554 = vstv %s553
    %v555 = vmul.f32 %v554, %v550
    %s556 = sadd.f32 %s551, 1e-06
    %v557 = vstv %s556
    %v558 = vadd.f32 %v555, %v557
    %v559 = vmul.f32 %v552, %v537
    %v560 = vmul.f32 %v531, %v558
    %vm561 = vcmp.lt.f32.partialorder %v559, %v560
    %v562 = vsel %vm561, %v552, %v531
    %v563 = vsel %vm561, %v558, %v537
    %s564 = sld [smem:[#allocation7 + $0x84]]
    %v565 = vstv %s564
    %v566 = vmul.f32 %v105, %v565
    %v567 = vadd.f32 %v541, %v566
    %s568 = sld [smem:[#allocation2 + $0x104]]
    %v569 = vstv %s568
    %v570 = vsub.f32 %v133, %v569
    %v571 = vmul.f32 %v570, %v570
    %s572 = sld [smem:[#allocation4 + $0x104]]
    %v573 = vstv %s572
    %v574 = vmul.f32 %v571, %v573
    %v575 = vmul.f32 %v574, 1.442695
    %v576 = vpow.pop %v575
    %s577 = sld [smem:[#allocation6 + $0x104]]
    %v578 = vadd.f32 %v576, 1e-06
    %s579 = ssub.f32 1.0, %s577
    %v580 = vstv %s579
    %v581 = vmul.f32 %v580, %v576
    %s582 = sadd.f32 %s577, 1e-06
    %v583 = vstv %s582
    %v584 = vadd.f32 %v581, %v583
    %v585 = vmul.f32 %v578, %v563
    %v586 = vmul.f32 %v562, %v584
    %vm587 = vcmp.lt.f32.partialorder %v585, %v586
    %v588 = vsel %vm587, %v578, %v562
    %v589 = vsel %vm587, %v584, %v563
    %s590 = sld [smem:[#allocation7 + $0x104]]
    %v591 = vstv %s590
    %v592 = vmul.f32 %v133, %v591
    %v593 = vadd.f32 %v567, %v592
    %s594 = sld [smem:[#allocation2 + $0x184]]
    %v595 = vstv %s594
    %v596 = vsub.f32 %v161, %v595
    %v597 = vmul.f32 %v596, %v596
    %s598 = sld [smem:[#allocation4 + $0x184]]
    %v599 = vstv %s598
    %v600 = vmul.f32 %v597, %v599
    %v601 = vmul.f32 %v600, 1.442695
    %v602 = vpow.pop %v601
    %s603 = sld [smem:[#allocation6 + $0x184]]
    %v604 = vadd.f32 %v602, 1e-06
    %s605 = ssub.f32 1.0, %s603
    %v606 = vstv %s605
    %v607 = vmul.f32 %v606, %v602
    %s608 = sadd.f32 %s603, 1e-06
    %v609 = vstv %s608
    %v610 = vadd.f32 %v607, %v609
    %v611 = vmul.f32 %v604, %v589
    %v612 = vmul.f32 %v588, %v610
    %vm613 = vcmp.lt.f32.partialorder %v611, %v612
    %v614 = vsel %vm613, %v604, %v588
    %v615 = vsel %vm613, %v610, %v589
    %s616 = sld [smem:[#allocation7 + $0x184]]
    %v617 = vstv %s616
    %v618 = vmul.f32 %v161, %v617
    %v619 = vadd.f32 %v593, %v618
    %s620 = sld [smem:[#allocation9 + $0x4]]
    %v621 = vstv %s620
    %v622 = vadd.f32 %v619, %v621
    %v623 = vrcp.pop %v615
    %v624 = vmul.f32 %v614, %v623
    %v625 = vmul.f32 %v624, %v622
    %v626 = vadd.f32 %v518, %v625
    %v627 = vand.u32 2147483647, %v624
    %v628 = vadd.f32 %v520, %v627
    %v629 = vmax.f32 %v628, 1e-12
    %v630 = vrcp.pop %v629
    %v631 = vmul.f32 %v626, %v630
    %632 = vst [vmem:[%s6] sm:$0x1] %v631
    // Predicated region
    $region46: #{unfis_forward.1} parent=1 // pred_check
      _
    $region47: #{unfis_forward.1} parent=1 // pred_check_branch
      %634 = sbr.rel (0) target = $region49
    $region48: #{unfis_forward.1} parent=1 // pred_region
      _
    $region49: #{unfis_forward.1} parent=1 // pred_fallthru
      _
    // Predicated region
    $region50: #{unfis_forward.1} parent=1 // pred_check
      _
    $region51: #{unfis_forward.1} parent=1 // pred_check_branch
      %636 = sbr.rel (0) target = $region53
    $region52: #{unfis_forward.1} parent=1 // pred_region
      _
    $region53: #{unfis_forward.1} parent=1 // pred_fallthru
      _
    %637 = vsyncpa [#allocation3], 1
    %638 = vsyncpa [#allocation5], 1
    %639 = vsyncpa [#allocation8], 1

</llo_original>
